<compile_context>
chip_gen: v7x
topology: tpu7x:2x2x1
jax: 0.10.0
libtpu: 0.0.40
codegen_flags: <defaults>
</compile_context>

<pallas_src>
import jax
import jax.numpy as jnp
from jax import lax
from jax.experimental import pallas as pl
from jax.experimental.pallas import tpu as pltpu


# ----------------------------- Pallas kernels ------------------------------

def conv_relu_pool_kernel(p_ref, w_ref, b_ref, o_ref):
    """Lane-dense fused conv + ReLU + 2x2 max-pool.

    p_ref: (4, K, Mblk)  im2col patches, one (K, Mblk) slab per 2x2 pool offset,
                         spatial*batch on the lane (last) dim.
    w_ref: (Cout, K)     conv weights (channels on sublanes).
    b_ref: (Cout, 1)     bias.
    o_ref: (Cout, Mblk)  pooled output, lane-dense.
    """
    w = w_ref[...]
    # One MXU matmul per pool offset; running elementwise max == 2x2 max-pool.
    acc = jnp.dot(w, p_ref[0], preferred_element_type=jnp.float32)
    for d in range(1, 4):                        # static unroll over pool window
        acc = jnp.maximum(acc, jnp.dot(w, p_ref[d],
                                       preferred_element_type=jnp.float32))
    # bias + ReLU exactly once, after the max (monotone => equivalent).
    o_ref[...] = jnp.maximum(acc + b_ref[...], 0.0)


def mlp_kernel(x_ref, w1_ref, b1_ref, w2_ref, b2_ref, w3_ref, b3_ref, o_ref):
    """fc1+ReLU+fc2+ReLU+fc3 fused; batch on the lane dim (transposed layout)."""
    h = jnp.dot(w1_ref[...], x_ref[...], preferred_element_type=jnp.float32) + b1_ref[...]
    h = jnp.maximum(h, 0.0)
    h = jnp.dot(w2_ref[...], h, preferred_element_type=jnp.float32) + b2_ref[...]
    h = jnp.maximum(h, 0.0)
    o_ref[...] = jnp.dot(w3_ref[...], h, preferred_element_type=jnp.float32) + b3_ref[...]


# ----------------------------- kernel wrappers ------------------------------

def _round_up(x, m):
    return ((x + m - 1) // m) * m


def _pad_lanes(a, target):
    pad = target - a.shape[-1]
    if pad == 0:
        return a
    return jnp.pad(a, [(0, 0)] * (a.ndim - 1) + [(0, pad)])


def conv_relu_pool(patches, w, b, *, m_block):
    """patches: (4, K, Mpad) with Mpad % m_block == 0. Returns (Cout, Mpad)."""
    P, K, m_pad = patches.shape
    cout = w.shape[0]
    return pl.pallas_call(
        conv_relu_pool_kernel,
        out_shape=jax.ShapeDtypeStruct((cout, m_pad), jnp.float32),
        grid=(m_pad // m_block,),
        in_specs=[
            pl.BlockSpec((P, K, m_block), lambda n: (0, 0, n)),
            pl.BlockSpec((cout, K), lambda n: (0, 0)),     # weights stay resident
            pl.BlockSpec((cout, 1), lambda n: (0, 0)),
        ],
        out_specs=pl.BlockSpec((cout, m_block), lambda n: (0, n)),
        compiler_params=pltpu.CompilerParams(dimension_semantics=("parallel",)),
    )(patches, w, b)


def mlp(x_t, w1, b1, w2, b2, w3, b3, *, n_block):
    """x_t: (in_dim, Npad) features-on-sublanes / batch-on-lanes.  Returns (10, Npad)."""
    in_dim, n_pad = x_t.shape
    out_dim = w3.shape[0]

    def const(shape):
        return pl.BlockSpec(shape, lambda i: (0, 0))       # resident across the grid

    return pl.pallas_call(
        mlp_kernel,
        out_shape=jax.ShapeDtypeStruct((out_dim, n_pad), jnp.float32),
        grid=(n_pad // n_block,),
        in_specs=[
            pl.BlockSpec((in_dim, n_block), lambda i: (0, i)),
            const(w1.shape), const(b1.shape),
            const(w2.shape), const(b2.shape),
            const(w3.shape), const(b3.shape),
        ],
        out_specs=pl.BlockSpec((out_dim, n_block), lambda i: (0, i)),
        compiler_params=pltpu.CompilerParams(dimension_semantics=("parallel",)),
    )(x_t, w1, b1, w2, b2, w3, b3)


# ------------------------------- JAX glue -----------------------------------

def im2col_pooled_cm(x_cnhw, ksize=5, pool=2, spatial_major=False):
    """Channel-major, pool-window-major im2col.

    Returns patches of shape (pool*pool, C*K*K, M) with
      patches[dh*pool+dw, c*K*K+kh*K+kw, m] = x[c, n, pool*i+dh+kh, pool*j+dw+kw]
    where m = n*Hp*Wp + i*Wp + j  (batch-major)  or  (i*Wp + j)*N + n  (spatial-major).
    """
    C, N, H, W = x_cnhw.shape
    Hc, Wc = H - ksize + 1, W - ksize + 1
    Hp, Wp = Hc // pool, Wc // pool
    dh = jnp.arange(pool).reshape(pool, 1, 1, 1, 1, 1)
    dw = jnp.arange(pool).reshape(1, pool, 1, 1, 1, 1)
    ii = jnp.arange(Hp).reshape(1, 1, Hp, 1, 1, 1)
    jj = jnp.arange(Wp).reshape(1, 1, 1, Wp, 1, 1)
    kh = jnp.arange(ksize).reshape(1, 1, 1, 1, ksize, 1)
    kw = jnp.arange(ksize).reshape(1, 1, 1, 1, 1, ksize)
    h_idx = pool * ii + dh + kh
    w_idx = pool * jj + dw + kw
    h_idx, w_idx = jnp.broadcast_arrays(h_idx, w_idx)          # (pool,pool,Hp,Wp,K,K)
    patches = x_cnhw[:, :, h_idx, w_idx]                       # (C,N,pool,pool,Hp,Wp,K,K)
    if spatial_major:
        perm = (2, 3, 0, 6, 7, 4, 5, 1)                        # (dh,dw,c,kh,kw,i,j,n)
    else:
        perm = (2, 3, 0, 6, 7, 1, 4, 5)                        # (dh,dw,c,kh,kw,n,i,j)
    patches = jnp.transpose(patches, perm)
    return patches.reshape(pool * pool, C * ksize * ksize, N * Hp * Wp), (Hp, Wp)


def init_params(key):
    """Deterministic init mimicking PyTorch's default U(-1/sqrt(fan_in), +)."""
    def uni(k, shape, fan_in):
        b = 1.0 / float(fan_in) ** 0.5
        return jax.random.uniform(k, shape, jnp.float32, -b, b)

    ks = jax.random.split(key, 10)
    return {
        "conv1_w": uni(ks[0], (6, 1, 5, 5), 25),   "conv1_b": uni(ks[1], (6,), 25),
        "conv2_w": uni(ks[2], (16, 6, 5, 5), 150), "conv2_b": uni(ks[3], (16,), 150),
        "fc1_w": uni(ks[4], (120, 256), 256),      "fc1_b": uni(ks[5], (120,), 256),
        "fc2_w": uni(ks[6], (84, 120), 120),       "fc2_b": uni(ks[7], (84,), 120),
        "fc3_w": uni(ks[8], (10, 84), 84),         "fc3_b": uni(ks[9], (10,), 84),
        # nn.Parameter `r` (28,28) zeros -- present in the module but unused in forward.
        "r": jnp.zeros((28, 28), jnp.float32),
    }


@jax.jit
def net_forward(x, params):
    N = x.shape[0]

    # ---- weight prep (traced once; XLA folds it) ----
    w1c = params["conv1_w"].reshape(6, 25)          # (Cout, Cin*K*K), k = c*25+kh*5+kw
    b1c = params["conv1_b"].reshape(6, 1)
    w2c = params["conv2_w"].reshape(16, 150)
    b2c = params["conv2_b"].reshape(16, 1)
    # FC weights already (out, in); zero-pad hidden widths 120->128, 84->128 so the
    # fused MLP keeps full (8,128)-aligned tiles.  Zero pads keep the math exact.
    w1f = jnp.zeros((128, 256), jnp.float32).at[:120, :].set(params["fc1_w"])
    b1f = jnp.zeros((128, 1), jnp.float32).at[:120, 0].set(params["fc1_b"])
    w2f = jnp.zeros((128, 128), jnp.float32).at[:84, :120].set(params["fc2_w"])
    b2f = jnp.zeros((128, 1), jnp.float32).at[:84, 0].set(params["fc2_b"])
    w3f = jnp.zeros((10, 128), jnp.float32).at[:, :84].set(params["fc3_w"])
    b3f = params["fc3_b"].reshape(10, 1)

    # ---- Stage 1: conv1(1->6,k5)+ReLU+2x2 pool   28x28 -> 24x24 -> 12x12 ----
    x_cn = jnp.transpose(x, (1, 0, 2, 3))                       # (1,N,28,28): C=1, free
    p1, (hp1, wp1) = im2col_pooled_cm(x_cn, 5, 2, spatial_major=False)
    m1 = N * hp1 * wp1
    mblk1 = min(1024, _round_up(m1, 128))
    m1p = _round_up(m1, mblk1)
    y1 = conv_relu_pool(_pad_lanes(p1, m1p), w1c, b1c, m_block=mblk1)[:, :m1]
    y1 = y1.reshape(6, N, hp1, wp1)                             # channel-major activation

    # ---- Stage 2: conv2(6->16,k5)+ReLU+2x2 pool  12x12 -> 8x8 -> 4x4 ----
    # spatial-major lane order so the flatten below equals torch's view(-1, 16*4*4).
    p2, (hp2, wp2) = im2col_pooled_cm(y1, 5, 2, spatial_major=True)
    m2 = N * hp2 * wp2
    mblk2 = min(1024, _round_up(m2, 128))
    m2p = _round_up(m2, mblk2)
    y2 = conv_relu_pool(_pad_lanes(p2, m2p), w2c, b2c, m_block=mblk2)[:, :m2]
    # y2[c, (i*wp2+j)*N + n]  ->  featT[c*16 + i*4 + j, n]  == torch view(-1,256).T
    feat_t = y2.reshape(16 * hp2 * wp2, N)

    # ---- Stage 3: fused fc1 -> ReLU -> fc2 -> ReLU -> fc3 (batch on lanes) ----
    n_pad = _round_up(N, 128)
    n_blk = min(512, n_pad)
    out_t = mlp(_pad_lanes(feat_t, n_pad), w1f, b1f, w2f, b2f, w3f, b3f, n_block=n_blk)
    return out_t[:, :N].T                                       # (N, 10)


def reference_forward(x, p):
    """Pure-JAX reference replicating the PyTorch forward."""
    dn = ("NCHW", "OIHW", "NCHW")
    y = lax.conv_general_dilated(x, p["conv1_w"], (1, 1), "VALID", dimension_numbers=dn)
    y = jnp.maximum(y + p["conv1_b"][None, :, None, None], 0.0)
    y = lax.reduce_window(y, -jnp.inf, lax.max, (1, 1, 2, 2), (1, 1, 2, 2), "VALID")
    y = lax.conv_general_dilated(y, p["conv2_w"], (1, 1), "VALID", dimension_numbers=dn)
    y = jnp.maximum(y + p["conv2_b"][None, :, None, None], 0.0)
    y = lax.reduce_window(y, -jnp.inf, lax.max, (1, 1, 2, 2), (1, 1, 2, 2), "VALID")
    y = y.reshape(y.shape[0], -1)
    y = jnp.maximum(y @ p["fc1_w"].T + p["fc1_b"], 0.0)
    y = jnp.maximum(y @ p["fc2_w"].T + p["fc2_b"], 0.0)
    return y @ p["fc3_w"].T + p["fc3_b"]


if __name__ == "__main__":
    key = jax.random.PRNGKey(0)
    pkey, xkey = jax.random.split(key)
    params = init_params(pkey)

    # fc1 expects 16*4*4 features => spatial must be 28x28 (LeNet on MNIST-sized input).
    x = jax.random.normal(xkey, (2, 1, 28, 28), jnp.float32)

    out = jax.block_until_ready(net_forward(x, params))
    ref = reference_forward(x, params)
    assert out.shape == (2, 10), out.shape
    max_err = float(jnp.max(jnp.abs(out - ref)))
    assert jnp.allclose(out, ref, rtol=5e-3, atol=5e-3), max_err

    print("KERNEL_OK")
</pallas_src>

<mosaic_0001>
module attributes {stable_mosaic.version = 11 : i64} {
  func.func @conv_relu_pool_kernel(%arg0: i32, %arg1: memref<4x25x384xf32, #tpu.memory_space<vmem>>, %arg2: memref<6x25xf32, #tpu.memory_space<vmem>>, %arg3: memref<6x1xf32, #tpu.memory_space<vmem>>, %arg4: memref<6x384xf32, #tpu.memory_space<vmem>>) attributes {dimension_semantics = [#tpu.dimension_semantics<parallel>], iteration_bounds = array<i64: 1>, scalar_prefetch = 0 : i64, scratch_operands = 0 : i64, tpu.core_type = #tpu.core_type<tc>, window_params = [{transform_indices = @transform_0, window_bounds = array<i64: 4, 25, 384>}, {pipeline_mode = #tpu.pipeline_mode<synchronous>, transform_indices = @transform_1, window_bounds = array<i64: 6, 25>}, {pipeline_mode = #tpu.pipeline_mode<synchronous>, transform_indices = @transform_2, window_bounds = array<i64: 6, 1>}, {transform_indices = @transform_3, window_bounds = array<i64: 6, 384>}]} {
    %c0 = arith.constant 0 : index
    %c0_0 = arith.constant 0 : index
    %0 = vector.load %arg2[%c0, %c0_0] : memref<6x25xf32, #tpu.memory_space<vmem>>, vector<6x25xf32>
    %c0_1 = arith.constant 0 : index
    %c0_2 = arith.constant 0 : index
    %c0_3 = arith.constant 0 : index
    %1 = vector.load %arg1[%c0_1, %c0_2, %c0_3] : memref<4x25x384xf32, #tpu.memory_space<vmem>>, vector<1x25x384xf32>
    %2 = vector.shape_cast %1 : vector<1x25x384xf32> to vector<25x384xf32>
    %cst = arith.constant dense<0.000000e+00> : vector<6x384xf32>
    %3 = tpu.matmul %0, %2, %cst {dimension_numbers = #tpu.dot_dimension_numbers<[1], [0], [0], [1], [0, 0, 1, 1], [], []>} : vector<6x25xf32>, vector<25x384xf32>, vector<6x384xf32> -> vector<6x384xf32>
    %c1 = arith.constant 1 : index
    %c0_4 = arith.constant 0 : index
    %c0_5 = arith.constant 0 : index
    %4 = vector.load %arg1[%c1, %c0_4, %c0_5] : memref<4x25x384xf32, #tpu.memory_space<vmem>>, vector<1x25x384xf32>
    %5 = vector.shape_cast %4 : vector<1x25x384xf32> to vector<25x384xf32>
    %cst_6 = arith.constant dense<0.000000e+00> : vector<6x384xf32>
    %6 = tpu.matmul %0, %5, %cst_6 {dimension_numbers = #tpu.dot_dimension_numbers<[1], [0], [0], [1], [0, 0, 1, 1], [], []>} : vector<6x25xf32>, vector<25x384xf32>, vector<6x384xf32> -> vector<6x384xf32>
    %7 = arith.maximumf %3, %6 : vector<6x384xf32>
    %c2 = arith.constant 2 : index
    %c0_7 = arith.constant 0 : index
    %c0_8 = arith.constant 0 : index
    %8 = vector.load %arg1[%c2, %c0_7, %c0_8] : memref<4x25x384xf32, #tpu.memory_space<vmem>>, vector<1x25x384xf32>
    %9 = vector.shape_cast %8 : vector<1x25x384xf32> to vector<25x384xf32>
    %cst_9 = arith.constant dense<0.000000e+00> : vector<6x384xf32>
    %10 = tpu.matmul %0, %9, %cst_9 {dimension_numbers = #tpu.dot_dimension_numbers<[1], [0], [0], [1], [0, 0, 1, 1], [], []>} : vector<6x25xf32>, vector<25x384xf32>, vector<6x384xf32> -> vector<6x384xf32>
    %11 = arith.maximumf %7, %10 : vector<6x384xf32>
    %c3 = arith.constant 3 : index
    %c0_10 = arith.constant 0 : index
    %c0_11 = arith.constant 0 : index
    %12 = vector.load %arg1[%c3, %c0_10, %c0_11] : memref<4x25x384xf32, #tpu.memory_space<vmem>>, vector<1x25x384xf32>
    %13 = vector.shape_cast %12 : vector<1x25x384xf32> to vector<25x384xf32>
    %cst_12 = arith.constant dense<0.000000e+00> : vector<6x384xf32>
    %14 = tpu.matmul %0, %13, %cst_12 {dimension_numbers = #tpu.dot_dimension_numbers<[1], [0], [0], [1], [0, 0, 1, 1], [], []>} : vector<6x25xf32>, vector<25x384xf32>, vector<6x384xf32> -> vector<6x384xf32>
    %15 = arith.maximumf %11, %14 : vector<6x384xf32>
    %c0_13 = arith.constant 0 : index
    %c0_14 = arith.constant 0 : index
    %16 = vector.load %arg3[%c0_13, %c0_14] : memref<6x1xf32, #tpu.memory_space<vmem>>, vector<6x1xf32>
    %17 = vector.broadcast %16 : vector<6x1xf32> to vector<6x384xf32>
    %18 = arith.addf %15, %17 : vector<6x384xf32>
    %cst_15 = arith.constant 0.000000e+00 : f32
    %19 = vector.broadcast %cst_15 : f32 to vector<6x384xf32>
    %20 = arith.maximumf %18, %19 : vector<6x384xf32>
    %c0_16 = arith.constant 0 : index
    %c0_17 = arith.constant 0 : index
    %21 = vector.load %arg4[%c0_16, %c0_17] : memref<6x384xf32, #tpu.memory_space<vmem>>, vector<6x384xf32>
    tpu.vector_store %arg4[%c0_16, %c0_17], %20 {strides = array<i32>} : memref<6x384xf32, #tpu.memory_space<vmem>>, vector<6x384xf32>,
    return
  }
  func.func @transform_0(%arg0: i32) -> (i32, i32, i32) {
    %c0_i32 = arith.constant 0 : i32
    %c0_i32_0 = arith.constant 0 : i32
    %c0_i32_1 = arith.constant 0 : i32
    return %c0_i32, %c0_i32_0, %arg0 : i32, i32, i32
  }
  func.func @transform_1(%arg0: i32) -> (i32, i32) {
    %c0_i32 = arith.constant 0 : i32
    %c0_i32_0 = arith.constant 0 : i32
    %c0_i32_1 = arith.constant 0 : i32
    return %c0_i32, %c0_i32_0 : i32, i32
  }
  func.func @transform_2(%arg0: i32) -> (i32, i32) {
    %c0_i32 = arith.constant 0 : i32
    %c0_i32_0 = arith.constant 0 : i32
    %c0_i32_1 = arith.constant 0 : i32
    return %c0_i32, %c0_i32_0 : i32, i32
  }
  func.func @transform_3(%arg0: i32) -> (i32, i32) {
    %c0_i32 = arith.constant 0 : i32
    %c0_i32_0 = arith.constant 0 : i32
    return %c0_i32, %arg0 : i32, i32
  }
}

module attributes {stable_mosaic.version = 11 : i64} {
  func.func @conv_relu_pool_kernel(%arg0: i32, %arg1: memref<4x150x128xf32, #tpu.memory_space<vmem>>, %arg2: memref<16x150xf32, #tpu.memory_space<vmem>>, %arg3: memref<16x1xf32, #tpu.memory_space<vmem>>, %arg4: memref<16x128xf32, #tpu.memory_space<vmem>>) attributes {dimension_semantics = [#tpu.dimension_semantics<parallel>], iteration_bounds = array<i64: 1>, scalar_prefetch = 0 : i64, scratch_operands = 0 : i64, tpu.core_type = #tpu.core_type<tc>, window_params = [{transform_indices = @transform_0, window_bounds = array<i64: 4, 150, 128>}, {pipeline_mode = #tpu.pipeline_mode<synchronous>, transform_indices = @transform_1, window_bounds = array<i64: 16, 150>}, {pipeline_mode = #tpu.pipeline_mode<synchronous>, transform_indices = @transform_2, window_bounds = array<i64: 16, 1>}, {transform_indices = @transform_3, window_bounds = array<i64: 16, 128>}]} {
    %c0 = arith.constant 0 : index
    %c0_0 = arith.constant 0 : index
    %0 = vector.load %arg2[%c0, %c0_0] : memref<16x150xf32, #tpu.memory_space<vmem>>, vector<16x150xf32>
    %c0_1 = arith.constant 0 : index
    %c0_2 = arith.constant 0 : index
    %c0_3 = arith.constant 0 : index
    %1 = vector.load %arg1[%c0_1, %c0_2, %c0_3] : memref<4x150x128xf32, #tpu.memory_space<vmem>>, vector<1x150x128xf32>
    %2 = vector.shape_cast %1 : vector<1x150x128xf32> to vector<150x128xf32>
    %cst = arith.constant dense<0.000000e+00> : vector<16x128xf32>
    %3 = tpu.matmul %0, %2, %cst {dimension_numbers = #tpu.dot_dimension_numbers<[1], [0], [0], [1], [0, 0, 1, 1], [], []>} : vector<16x150xf32>, vector<150x128xf32>, vector<16x128xf32> -> vector<16x128xf32>
    %c1 = arith.constant 1 : index
    %c0_4 = arith.constant 0 : index
    %c0_5 = arith.constant 0 : index
    %4 = vector.load %arg1[%c1, %c0_4, %c0_5] : memref<4x150x128xf32, #tpu.memory_space<vmem>>, vector<1x150x128xf32>
    %5 = vector.shape_cast %4 : vector<1x150x128xf32> to vector<150x128xf32>
    %cst_6 = arith.constant dense<0.000000e+00> : vector<16x128xf32>
    %6 = tpu.matmul %0, %5, %cst_6 {dimension_numbers = #tpu.dot_dimension_numbers<[1], [0], [0], [1], [0, 0, 1, 1], [], []>} : vector<16x150xf32>, vector<150x128xf32>, vector<16x128xf32> -> vector<16x128xf32>
    %7 = arith.maximumf %3, %6 : vector<16x128xf32>
    %c2 = arith.constant 2 : index
    %c0_7 = arith.constant 0 : index
    %c0_8 = arith.constant 0 : index
    %8 = vector.load %arg1[%c2, %c0_7, %c0_8] : memref<4x150x128xf32, #tpu.memory_space<vmem>>, vector<1x150x128xf32>
    %9 = vector.shape_cast %8 : vector<1x150x128xf32> to vector<150x128xf32>
    %cst_9 = arith.constant dense<0.000000e+00> : vector<16x128xf32>
    %10 = tpu.matmul %0, %9, %cst_9 {dimension_numbers = #tpu.dot_dimension_numbers<[1], [0], [0], [1], [0, 0, 1, 1], [], []>} : vector<16x150xf32>, vector<150x128xf32>, vector<16x128xf32> -> vector<16x128xf32>
    %11 = arith.maximumf %7, %10 : vector<16x128xf32>
    %c3 = arith.constant 3 : index
    %c0_10 = arith.constant 0 : index
    %c0_11 = arith.constant 0 : index
    %12 = vector.load %arg1[%c3, %c0_10, %c0_11] : memref<4x150x128xf32, #tpu.memory_space<vmem>>, vector<1x150x128xf32>
    %13 = vector.shape_cast %12 : vector<1x150x128xf32> to vector<150x128xf32>
    %cst_12 = arith.constant dense<0.000000e+00> : vector<16x128xf32>
    %14 = tpu.matmul %0, %13, %cst_12 {dimension_numbers = #tpu.dot_dimension_numbers<[1], [0], [0], [1], [0, 0, 1, 1], [], []>} : vector<16x150xf32>, vector<150x128xf32>, vector<16x128xf32> -> vector<16x128xf32>
    %15 = arith.maximumf %11, %14 : vector<16x128xf32>
    %c0_13 = arith.constant 0 : index
    %c0_14 = arith.constant 0 : index
    %16 = vector.load %arg3[%c0_13, %c0_14] : memref<16x1xf32, #tpu.memory_space<vmem>>, vector<16x1xf32>
    %17 = vector.broadcast %16 : vector<16x1xf32> to vector<16x128xf32>
    %18 = arith.addf %15, %17 : vector<16x128xf32>
    %cst_15 = arith.constant 0.000000e+00 : f32
    %19 = vector.broadcast %cst_15 : f32 to vector<16x128xf32>
    %20 = arith.maximumf %18, %19 : vector<16x128xf32>
    %c0_16 = arith.constant 0 : index
    %c0_17 = arith.constant 0 : index
    %21 = vector.load %arg4[%c0_16, %c0_17] : memref<16x128xf32, #tpu.memory_space<vmem>>, vector<16x128xf32>
    tpu.vector_store %arg4[%c0_16, %c0_17], %20 {strides = array<i32>} : memref<16x128xf32, #tpu.memory_space<vmem>>, vector<16x128xf32>,
    return
  }
  func.func @transform_0(%arg0: i32) -> (i32, i32, i32) {
    %c0_i32 = arith.constant 0 : i32
    %c0_i32_0 = arith.constant 0 : i32
    %c0_i32_1 = arith.constant 0 : i32
    return %c0_i32, %c0_i32_0, %arg0 : i32, i32, i32
  }
  func.func @transform_1(%arg0: i32) -> (i32, i32) {
    %c0_i32 = arith.constant 0 : i32
    %c0_i32_0 = arith.constant 0 : i32
    %c0_i32_1 = arith.constant 0 : i32
    return %c0_i32, %c0_i32_0 : i32, i32
  }
  func.func @transform_2(%arg0: i32) -> (i32, i32) {
    %c0_i32 = arith.constant 0 : i32
    %c0_i32_0 = arith.constant 0 : i32
    %c0_i32_1 = arith.constant 0 : i32
    return %c0_i32, %c0_i32_0 : i32, i32
  }
  func.func @transform_3(%arg0: i32) -> (i32, i32) {
    %c0_i32 = arith.constant 0 : i32
    %c0_i32_0 = arith.constant 0 : i32
    return %c0_i32, %arg0 : i32, i32
  }
}

module attributes {stable_mosaic.version = 11 : i64} {
  func.func @mlp_kernel(%arg0: i32, %arg1: memref<256x128xf32, #tpu.memory_space<vmem>>, %arg2: memref<128x256xf32, #tpu.memory_space<vmem>>, %arg3: memref<128x1xf32, #tpu.memory_space<vmem>>, %arg4: memref<128x128xf32, #tpu.memory_space<vmem>>, %arg5: memref<128x1xf32, #tpu.memory_space<vmem>>, %arg6: memref<10x128xf32, #tpu.memory_space<vmem>>, %arg7: memref<10x1xf32, #tpu.memory_space<vmem>>, %arg8: memref<10x128xf32, #tpu.memory_space<vmem>>) attributes {dimension_semantics = [#tpu.dimension_semantics<parallel>], iteration_bounds = array<i64: 1>, scalar_prefetch = 0 : i64, scratch_operands = 0 : i64, tpu.core_type = #tpu.core_type<tc>, window_params = [{transform_indices = @transform_0, window_bounds = array<i64: 256, 128>}, {pipeline_mode = #tpu.pipeline_mode<synchronous>, transform_indices = @transform_1, window_bounds = array<i64: 128, 256>}, {pipeline_mode = #tpu.pipeline_mode<synchronous>, transform_indices = @transform_2, window_bounds = array<i64: 128, 1>}, {pipeline_mode = #tpu.pipeline_mode<synchronous>, transform_indices = @transform_3, window_bounds = array<i64: 128, 128>}, {pipeline_mode = #tpu.pipeline_mode<synchronous>, transform_indices = @transform_4, window_bounds = array<i64: 128, 1>}, {pipeline_mode = #tpu.pipeline_mode<synchronous>, transform_indices = @transform_5, window_bounds = array<i64: 10, 128>}, {pipeline_mode = #tpu.pipeline_mode<synchronous>, transform_indices = @transform_6, window_bounds = array<i64: 10, 1>}, {transform_indices = @transform_7, window_bounds = array<i64: 10, 128>}]} {
    %c0 = arith.constant 0 : index
    %c0_0 = arith.constant 0 : index
    %0 = vector.load %arg2[%c0, %c0_0] : memref<128x256xf32, #tpu.memory_space<vmem>>, vector<128x256xf32>
    %c0_1 = arith.constant 0 : index
    %c0_2 = arith.constant 0 : index
    %1 = vector.load %arg1[%c0_1, %c0_2] : memref<256x128xf32, #tpu.memory_space<vmem>>, vector<256x128xf32>
    %cst = arith.constant dense<0.000000e+00> : vector<128x128xf32>
    %2 = tpu.matmul %0, %1, %cst {dimension_numbers = #tpu.dot_dimension_numbers<[1], [0], [0], [1], [0, 0, 1, 1], [], []>} : vector<128x256xf32>, vector<256x128xf32>, vector<128x128xf32> -> vector<128x128xf32>
    %c0_3 = arith.constant 0 : index
    %c0_4 = arith.constant 0 : index
    %3 = vector.load %arg3[%c0_3, %c0_4] : memref<128x1xf32, #tpu.memory_space<vmem>>, vector<128x1xf32>
    %4 = vector.broadcast %3 : vector<128x1xf32> to vector<128x128xf32>
    %5 = arith.addf %2, %4 : vector<128x128xf32>
    %cst_5 = arith.constant 0.000000e+00 : f32
    %6 = vector.broadcast %cst_5 : f32 to vector<128x128xf32>
    %7 = arith.maximumf %5, %6 : vector<128x128xf32>
    %c0_6 = arith.constant 0 : index
    %c0_7 = arith.constant 0 : index
    %8 = vector.load %arg4[%c0_6, %c0_7] : memref<128x128xf32, #tpu.memory_space<vmem>>, vector<128x128xf32>
    %cst_8 = arith.constant dense<0.000000e+00> : vector<128x128xf32>
    %9 = tpu.matmul %8, %7, %cst_8 {dimension_numbers = #tpu.dot_dimension_numbers<[1], [0], [0], [1], [0, 0, 1, 1], [], []>} : vector<128x128xf32>, vector<128x128xf32>, vector<128x128xf32> -> vector<128x128xf32>
    %c0_9 = arith.constant 0 : index
    %c0_10 = arith.constant 0 : index
    %10 = vector.load %arg5[%c0_9, %c0_10] : memref<128x1xf32, #tpu.memory_space<vmem>>, vector<128x1xf32>
    %11 = vector.broadcast %10 : vector<128x1xf32> to vector<128x128xf32>
    %12 = arith.addf %9, %11 : vector<128x128xf32>
    %cst_11 = arith.constant 0.000000e+00 : f32
    %13 = vector.broadcast %cst_11 : f32 to vector<128x128xf32>
    %14 = arith.maximumf %12, %13 : vector<128x128xf32>
    %c0_12 = arith.constant 0 : index
    %c0_13 = arith.constant 0 : index
    %15 = vector.load %arg6[%c0_12, %c0_13] : memref<10x128xf32, #tpu.memory_space<vmem>>, vector<10x128xf32>
    %cst_14 = arith.constant dense<0.000000e+00> : vector<10x128xf32>
    %16 = tpu.matmul %15, %14, %cst_14 {dimension_numbers = #tpu.dot_dimension_numbers<[1], [0], [0], [1], [0, 0, 1, 1], [], []>} : vector<10x128xf32>, vector<128x128xf32>, vector<10x128xf32> -> vector<10x128xf32>
    %c0_15 = arith.constant 0 : index
    %c0_16 = arith.constant 0 : index
    %17 = vector.load %arg7[%c0_15, %c0_16] : memref<10x1xf32, #tpu.memory_space<vmem>>, vector<10x1xf32>
    %18 = vector.broadcast %17 : vector<10x1xf32> to vector<10x128xf32>
    %19 = arith.addf %16, %18 : vector<10x128xf32>
    %c0_17 = arith.constant 0 : index
    %c0_18 = arith.constant 0 : index
    %20 = vector.load %arg8[%c0_17, %c0_18] : memref<10x128xf32, #tpu.memory_space<vmem>>, vector<10x128xf32>
    tpu.vector_store %arg8[%c0_17, %c0_18], %19 {strides = array<i32>} : memref<10x128xf32, #tpu.memory_space<vmem>>, vector<10x128xf32>,
    return
  }
  func.func @transform_0(%arg0: i32) -> (i32, i32) {
    %c0_i32 = arith.constant 0 : i32
    %c0_i32_0 = arith.constant 0 : i32
    return %c0_i32, %arg0 : i32, i32
  }
  func.func @transform_1(%arg0: i32) -> (i32, i32) {
    %c0_i32 = arith.constant 0 : i32
    %c0_i32_0 = arith.constant 0 : i32
    %c0_i32_1 = arith.constant 0 : i32
    return %c0_i32, %c0_i32_0 : i32, i32
  }
  func.func @transform_2(%arg0: i32) -> (i32, i32) {
    %c0_i32 = arith.constant 0 : i32
    %c0_i32_0 = arith.constant 0 : i32
    %c0_i32_1 = arith.constant 0 : i32
    return %c0_i32, %c0_i32_0 : i32, i32
  }
  func.func @transform_3(%arg0: i32) -> (i32, i32) {
    %c0_i32 = arith.constant 0 : i32
    %c0_i32_0 = arith.constant 0 : i32
    %c0_i32_1 = arith.constant 0 : i32
    return %c0_i32, %c0_i32_0 : i32, i32
  }
  func.func @transform_4(%arg0: i32) -> (i32, i32) {
    %c0_i32 = arith.constant 0 : i32
    %c0_i32_0 = arith.constant 0 : i32
    %c0_i32_1 = arith.constant 0 : i32
    return %c0_i32, %c0_i32_0 : i32, i32
  }
  func.func @transform_5(%arg0: i32) -> (i32, i32) {
    %c0_i32 = arith.constant 0 : i32
    %c0_i32_0 = arith.constant 0 : i32
    %c0_i32_1 = arith.constant 0 : i32
    return %c0_i32, %c0_i32_0 : i32, i32
  }
  func.func @transform_6(%arg0: i32) -> (i32, i32) {
    %c0_i32 = arith.constant 0 : i32
    %c0_i32_0 = arith.constant 0 : i32
    %c0_i32_1 = arith.constant 0 : i32
    return %c0_i32, %c0_i32_0 : i32, i32
  }
  func.func @transform_7(%arg0: i32) -> (i32, i32) {
    %c0_i32 = arith.constant 0 : i32
    %c0_i32_0 = arith.constant 0 : i32
    return %c0_i32, %arg0 : i32, i32
  }
}

</mosaic_0001>

<llo_original>
// kernel: net_forward.3
$region0: #{net_forward.3}
  #allocation0 [shape = 'u32[]', space=smem, size = 0x4, offset = 0x4, fixed_abs, tag = 'smem constant byte address 0x4 - core index']
  #allocation1 [shape = 'u32[144,128]{1,0:T(1,128)}', space=vmem, size = 0x12000, scoped, tag = 'internal scratch']
  %s0 = inlined_call_operand.vmem [shape: f32[4,25,384], index: 0, kind: input, shape index: {}]
  %s1 = inlined_call_operand.vmem [shape: f32[6,25], index: 1, kind: input, shape index: {}]
  %s2 = inlined_call_operand.vmem [shape: f32[6,1], index: 2, kind: input, shape index: {}]
  %s3 = inlined_call_operand.vmem [shape: f32[6,384], index: 3, kind: output, shape index: {}]
  %s4 = sld [smem:[#allocation0]]
  $region22: #{net_forward.3} parent=0
    _
  %s6 = ssub.s32 1, %s4
  %s7 = scalar_select 0, %s6, %s4
  // Predicated region
  $region2: #{net_forward.3} parent=0 // pred_check
    _
  $region3: #{net_forward.3} parent=0 // pred_check_branch
    %9 = sbr.rel (0) target = $region5
  $region4: #{net_forward.3} parent=0 // pred_region
    _
  $region5: #{net_forward.3} parent=0 // pred_fallthru
    _
  // Predicated region
  $region6: #{net_forward.3} parent=0 // pred_check
    _
  $region7: #{net_forward.3} parent=0 // pred_check_branch
    %11 = sbr.rel (0) target = $region9
  $region8: #{net_forward.3} parent=0 // pred_region
    _
  $region9: #{net_forward.3} parent=0 // pred_fallthru
    _
  // Predicated region
  $region10: #{net_forward.3} parent=0 // pred_check
    _
  $region11: #{net_forward.3} parent=0 // pred_check_branch
    %13 = sbr.rel (0) target = $region13
  $region12: #{net_forward.3} parent=0 // pred_region
    _
  $region13: #{net_forward.3} parent=0 // pred_fallthru
    _
  %v14 = vld [vmem:[%s1] sm:$0x3f]
  %v15 = vld [vmem:[%s0] sm:$0xff]
  %v16 = vld [vmem:[%s0 + $0x8] sm:$0xff]
  %v17 = vld [vmem:[%s0 + $0x10] sm:$0xff]
  %v18 = vld [vmem:[%s0 + $0x18] sm:$0xff]
  %v19 = vld [vmem:[%s0 + $0x20] sm:$0xff]
  %v20 = vld [vmem:[%s0 + $0x28] sm:$0xff]
  %v21 = vld [vmem:[%s0 + $0x30] sm:$0xff]
  %v22 = vld [vmem:[%s0 + $0x38] sm:$0xff]
  %v23 = vld [vmem:[%s0 + $0x40] sm:$0xff]
  %v24 = vld [vmem:[%s0 + $0x48] sm:$0x1]
  %v25 = vld [vmem:[%s0 + $0x50] sm:$0x1]
  %v26 = vld [vmem:[%s0 + $0x58] sm:$0x1]
  %vm27 = vcmask 203776
  %v29 = vsel %vm27, %v14, 0
  %vm31 = vcmask 1040384
  %v33 = vsel %vm31, %v24, 0
  %v36 = vsel %vm31, %v25, 0
  %v39 = vsel %vm31, %v26, 0
  %41 = vmatprep.subr.mxu0 %v16
  %42 = vmatpush1.msra.mxu0 %v15
  %43 = vmatprep.subr.mxu0 %v19
  %44 = vmatpush1.msra.mxu0 %v18
  %45 = vmatprep.subr.mxu0 %v22
  %46 = vmatpush1.msra.mxu0 %v21
  %47 = vmatprep.subr.mxu0 %v36
  %48 = vmatpush1.msra.mxu0 %v33
  %49 = vmatprep.subr.mxu0 0.0
  %50 = vmatpush1.msra.mxu0 0.0
  %51 = vmatprep.subr.mxu0 0.0
  %52 = vmatpush1.msra.mxu0 0.0
  %53 = vmatprep.subr.mxu0 0.0
  %54 = vmatpush1.msra.mxu0 0.0
  %55 = vmatprep.subr.mxu0 0.0
  %56 = vmatpush1.msra.mxu0 0.0
  %57 = vmatprep.subr.mxu0 0.0
  %58 = vmatpush1.msra.mxu0 0.0
  %59 = vmatprep.subr.mxu0 0.0
  %60 = vmatpush1.msra.mxu0 0.0
  %61 = vmatprep.subr.mxu0 0.0
  %62 = vmatpush1.msra.mxu0 0.0
  %63 = vmatprep.subr.mxu0 0.0
  %64 = vmatpush1.msra.mxu0 0.0
  %65 = vmatprep.subr.mxu0 0.0
  %66 = vmatpush1.msra.mxu0 0.0
  %67 = vmatprep.subr.mxu0 0.0
  %68 = vmatpush1.msra.mxu0 0.0
  %69 = vmatprep.subr.mxu0 0.0
  %70 = vmatpush1.msra.mxu0 0.0
  %71 = vmatprep.subr.mxu0 0.0
  %72 = vmatpush1.msra.mxu0 0.0
  %73 = vmatprep.subr.mxu0 0.0
  %74 = vmatpush1.msra.mxu0 0.0
  %75 = vmatprep.subr.mxu0 0.0
  %76 = vmatpush1.msra.mxu0 0.0
  %77 = vmatprep.subr.mxu0 0.0
  %78 = vmatpush1.msra.mxu0 0.0
  %79 = vmatprep.subr.mxu0 0.0
  %80 = vmatpush1.msra.mxu0 0.0
  %81 = vmatprep.subr.mxu0 0.0
  %82 = vmatpush1.msra.mxu0 0.0
  %83 = vmatprep.subr.mxu0 0.0
  %84 = vmatpush1.msra.mxu0 0.0
  %85 = vmatprep.subr.mxu0 0.0
  %86 = vmatpush1.msra.mxu0 0.0
  %87 = vmatprep.subr.mxu0 0.0
  %88 = vmatpush1.msra.mxu0 0.0
  %89 = vmatprep.subr.mxu0 0.0
  %90 = vmatpush1.msra.mxu0 0.0
  %91 = vmatprep.subr.mxu0 0.0
  %92 = vmatpush1.msra.mxu0 0.0
  %93 = vmatprep.subr.mxu0 0.0
  %94 = vmatpush1.msra.mxu0 0.0
  %95 = vmatprep.subr.mxu0 0.0
  %96 = vmatpush1.msra.mxu0 0.0
  %97 = vmatprep.subr.mxu0 0.0
  %98 = vmatpush1.msra.mxu0 0.0
  %99 = vmatprep.subr.mxu0 0.0
  %100 = vmatpush1.msra.mxu0 0.0
  %101 = vmatprep.subr.mxu0 0.0
  %102 = vmatpush1.msra.mxu0 0.0
  %103 = vmatprep.subr.mxu0 0.0
  %104 = vmatpush1.msra.mxu0 0.0
  %105 = vmatprep.mubr.f32.mxu0 0.0
  %106 = vmatmul.mubr.f32.gmra.mrb[0].mxu0 %v29
  %v107 = vpop.f32.mrb[0].mxu0
  %v108 = vadd.f32 0.0, %v107
  %v109 = vpop.f32.mrb[0].mxu0
  %v110 = vadd.f32 0.0, %v109
  %111 = vdwg.mxu0
  %112 = vmatprep.subr.mxu0 0.0
  %113 = vmatpush1.msra.mxu0 %v17
  %114 = vmatprep.subr.mxu0 0.0
  %115 = vmatpush1.msra.mxu0 %v20
  %116 = vmatprep.subr.mxu0 0.0
  %117 = vmatpush1.msra.mxu0 %v23
  %118 = vmatprep.subr.mxu0 0.0
  %119 = vmatpush1.msra.mxu0 %v39
  %120 = vmatprep.subr.mxu0 0.0
  %121 = vmatpush1.msra.mxu0 0.0
  %122 = vmatprep.subr.mxu0 0.0
  %123 = vmatpush1.msra.mxu0 0.0
  %124 = vmatprep.subr.mxu0 0.0
  %125 = vmatpush1.msra.mxu0 0.0
  %126 = vmatprep.subr.mxu0 0.0
  %127 = vmatpush1.msra.mxu0 0.0
  %128 = vmatprep.subr.mxu0 0.0
  %129 = vmatpush1.msra.mxu0 0.0
  %130 = vmatprep.subr.mxu0 0.0
  %131 = vmatpush1.msra.mxu0 0.0
  %132 = vmatprep.subr.mxu0 0.0
  %133 = vmatpush1.msra.mxu0 0.0
  %134 = vmatprep.subr.mxu0 0.0
  %135 = vmatpush1.msra.mxu0 0.0
  %136 = vmatprep.subr.mxu0 0.0
  %137 = vmatpush1.msra.mxu0 0.0
  %138 = vmatprep.subr.mxu0 0.0
  %139 = vmatpush1.msra.mxu0 0.0
  %140 = vmatprep.subr.mxu0 0.0
  %141 = vmatpush1.msra.mxu0 0.0
  %142 = vmatprep.subr.mxu0 0.0
  %143 = vmatpush1.msra.mxu0 0.0
  %144 = vmatprep.subr.mxu0 0.0
  %145 = vmatpush1.msra.mxu0 0.0
  %146 = vmatprep.subr.mxu0 0.0
  %147 = vmatpush1.msra.mxu0 0.0
  %148 = vmatprep.subr.mxu0 0.0
  %149 = vmatpush1.msra.mxu0 0.0
  %150 = vmatprep.subr.mxu0 0.0
  %151 = vmatpush1.msra.mxu0 0.0
  %152 = vmatprep.subr.mxu0 0.0
  %153 = vmatpush1.msra.mxu0 0.0
  %154 = vmatprep.subr.mxu0 0.0
  %155 = vmatpush1.msra.mxu0 0.0
  %156 = vmatprep.subr.mxu0 0.0
  %157 = vmatpush1.msra.mxu0 0.0
  %158 = vmatprep.subr.mxu0 0.0
  %159 = vmatpush1.msra.mxu0 0.0
  %160 = vmatprep.subr.mxu0 0.0
  %161 = vmatpush1.msra.mxu0 0.0
  %162 = vmatprep.subr.mxu0 0.0
  %163 = vmatpush1.msra.mxu0 0.0
  %164 = vmatprep.subr.mxu0 0.0
  %165 = vmatpush1.msra.mxu0 0.0
  %166 = vmatprep.subr.mxu0 0.0
  %167 = vmatpush1.msra.mxu0 0.0
  %168 = vmatprep.subr.mxu0 0.0
  %169 = vmatpush1.msra.mxu0 0.0
  %170 = vmatprep.subr.mxu0 0.0
  %171 = vmatpush1.msra.mxu0 0.0
  %172 = vmatprep.subr.mxu0 0.0
  %173 = vmatpush1.msra.mxu0 0.0
  %174 = vmatprep.subr.mxu0 0.0
  %175 = vmatpush1.msra.mxu0 0.0
  %176 = vmatprep.mubr.f32.mxu0 0.0
  %177 = vmatmul.mubr.f32.gmra.mrb[0].mxu0 %v29
  %v178 = vpop.f32.mrb[0].mxu0
  %v179 = vadd.f32 0.0, %v178
  %v180 = vpop.f32.mrb[0].mxu0
  %181 = vdwg.mxu0
  %s182 = scalar_lea.vmem %s0, 96
  %v183 = vld [vmem:[%s182] sm:$0xff]
  %v184 = vld [vmem:[%s182 + $0x8] sm:$0xff]
  %v185 = vld [vmem:[%s182 + $0x10] sm:$0xff]
  %v186 = vld [vmem:[%s182 + $0x18] sm:$0xff]
  %v187 = vld [vmem:[%s182 + $0x20] sm:$0xff]
  %v188 = vld [vmem:[%s182 + $0x28] sm:$0xff]
  %v189 = vld [vmem:[%s182 + $0x30] sm:$0xff]
  %v190 = vld [vmem:[%s182 + $0x38] sm:$0xff]
  %v191 = vld [vmem:[%s182 + $0x40] sm:$0xff]
  %v192 = vld [vmem:[%s182 + $0x48] sm:$0x1]
  %v193 = vld [vmem:[%s182 + $0x50] sm:$0x1]
  %v194 = vld [vmem:[%s182 + $0x58] sm:$0x1]
  %v196 = vsel %vm31, %v192, 0
  %v199 = vsel %vm31, %v193, 0
  %v202 = vsel %vm31, %v194, 0
  %204 = vmatprep.subr.mxu0 %v184
  %205 = vmatpush1.msra.mxu0 %v183
  %206 = vmatprep.subr.mxu0 %v187
  %207 = vmatpush1.msra.mxu0 %v186
  %208 = vmatprep.subr.mxu0 %v190
  %209 = vmatpush1.msra.mxu0 %v189
  %210 = vmatprep.subr.mxu0 %v199
  %211 = vmatpush1.msra.mxu0 %v196
  %212 = vmatprep.subr.mxu0 0.0
  %213 = vmatpush1.msra.mxu0 0.0
  %214 = vmatprep.subr.mxu0 0.0
  %215 = vmatpush1.msra.mxu0 0.0
  %216 = vmatprep.subr.mxu0 0.0
  %217 = vmatpush1.msra.mxu0 0.0
  %218 = vmatprep.subr.mxu0 0.0
  %219 = vmatpush1.msra.mxu0 0.0
  %220 = vmatprep.subr.mxu0 0.0
  %221 = vmatpush1.msra.mxu0 0.0
  %222 = vmatprep.subr.mxu0 0.0
  %223 = vmatpush1.msra.mxu0 0.0
  %224 = vmatprep.subr.mxu0 0.0
  %225 = vmatpush1.msra.mxu0 0.0
  %226 = vmatprep.subr.mxu0 0.0
  %227 = vmatpush1.msra.mxu0 0.0
  %228 = vmatprep.subr.mxu0 0.0
  %229 = vmatpush1.msra.mxu0 0.0
  %230 = vmatprep.subr.mxu0 0.0
  %231 = vmatpush1.msra.mxu0 0.0
  %232 = vmatprep.subr.mxu0 0.0
  %233 = vmatpush1.msra.mxu0 0.0
  %234 = vmatprep.subr.mxu0 0.0
  %235 = vmatpush1.msra.mxu0 0.0
  %236 = vmatprep.subr.mxu0 0.0
  %237 = vmatpush1.msra.mxu0 0.0
  %238 = vmatprep.subr.mxu0 0.0
  %239 = vmatpush1.msra.mxu0 0.0
  %240 = vmatprep.subr.mxu0 0.0
  %241 = vmatpush1.msra.mxu0 0.0
  %242 = vmatprep.subr.mxu0 0.0
  %243 = vmatpush1.msra.mxu0 0.0
  %244 = vmatprep.subr.mxu0 0.0
  %245 = vmatpush1.msra.mxu0 0.0
  %246 = vmatprep.subr.mxu0 0.0
  %247 = vmatpush1.msra.mxu0 0.0
  %248 = vmatprep.subr.mxu0 0.0
  %249 = vmatpush1.msra.mxu0 0.0
  %250 = vmatprep.subr.mxu0 0.0
  %251 = vmatpush1.msra.mxu0 0.0
  %252 = vmatprep.subr.mxu0 0.0
  %253 = vmatpush1.msra.mxu0 0.0
  %254 = vmatprep.subr.mxu0 0.0
  %255 = vmatpush1.msra.mxu0 0.0
  %256 = vmatprep.subr.mxu0 0.0
  %257 = vmatpush1.msra.mxu0 0.0
  %258 = vmatprep.subr.mxu0 0.0
  %259 = vmatpush1.msra.mxu0 0.0
  %260 = vmatprep.subr.mxu0 0.0
  %261 = vmatpush1.msra.mxu0 0.0
  %262 = vmatprep.subr.mxu0 0.0
  %263 = vmatpush1.msra.mxu0 0.0
  %264 = vmatprep.subr.mxu0 0.0
  %265 = vmatpush1.msra.mxu0 0.0
  %266 = vmatprep.subr.mxu0 0.0
  %267 = vmatpush1.msra.mxu0 0.0
  %268 = vmatprep.mubr.f32.mxu0 0.0
  %269 = vmatmul.mubr.f32.gmra.mrb[0].mxu0 %v29
  %v270 = vpop.f32.mrb[0].mxu0
  %v271 = vadd.f32 0.0, %v270
  %v272 = vpop.f32.mrb[0].mxu0
  %v273 = vadd.f32 0.0, %v272
  %274 = vdwg.mxu0
  %275 = vmatprep.subr.mxu0 0.0
  %276 = vmatpush1.msra.mxu0 %v185
  %277 = vmatprep.subr.mxu0 0.0
  %278 = vmatpush1.msra.mxu0 %v188
  %279 = vmatprep.subr.mxu0 0.0
  %280 = vmatpush1.msra.mxu0 %v191
  %281 = vmatprep.subr.mxu0 0.0
  %282 = vmatpush1.msra.mxu0 %v202
  %283 = vmatprep.subr.mxu0 0.0
  %284 = vmatpush1.msra.mxu0 0.0
  %285 = vmatprep.subr.mxu0 0.0
  %286 = vmatpush1.msra.mxu0 0.0
  %287 = vmatprep.subr.mxu0 0.0
  %288 = vmatpush1.msra.mxu0 0.0
  %289 = vmatprep.subr.mxu0 0.0
  %290 = vmatpush1.msra.mxu0 0.0
  %291 = vmatprep.subr.mxu0 0.0
  %292 = vmatpush1.msra.mxu0 0.0
  %293 = vmatprep.subr.mxu0 0.0
  %294 = vmatpush1.msra.mxu0 0.0
  %295 = vmatprep.subr.mxu0 0.0
  %296 = vmatpush1.msra.mxu0 0.0
  %297 = vmatprep.subr.mxu0 0.0
  %298 = vmatpush1.msra.mxu0 0.0
  %299 = vmatprep.subr.mxu0 0.0
  %300 = vmatpush1.msra.mxu0 0.0
  %301 = vmatprep.subr.mxu0 0.0
  %302 = vmatpush1.msra.mxu0 0.0
  %303 = vmatprep.subr.mxu0 0.0
  %304 = vmatpush1.msra.mxu0 0.0
  %305 = vmatprep.subr.mxu0 0.0
  %306 = vmatpush1.msra.mxu0 0.0
  %307 = vmatprep.subr.mxu0 0.0
  %308 = vmatpush1.msra.mxu0 0.0
  %309 = vmatprep.subr.mxu0 0.0
  %310 = vmatpush1.msra.mxu0 0.0
  %311 = vmatprep.subr.mxu0 0.0
  %312 = vmatpush1.msra.mxu0 0.0
  %313 = vmatprep.subr.mxu0 0.0
  %314 = vmatpush1.msra.mxu0 0.0
  %315 = vmatprep.subr.mxu0 0.0
  %316 = vmatpush1.msra.mxu0 0.0
  %317 = vmatprep.subr.mxu0 0.0
  %318 = vmatpush1.msra.mxu0 0.0
  %319 = vmatprep.subr.mxu0 0.0
  %320 = vmatpush1.msra.mxu0 0.0
  %321 = vmatprep.subr.mxu0 0.0
  %322 = vmatpush1.msra.mxu0 0.0
  %323 = vmatprep.subr.mxu0 0.0
  %324 = vmatpush1.msra.mxu0 0.0
  %325 = vmatprep.subr.mxu0 0.0
  %326 = vmatpush1.msra.mxu0 0.0
  %327 = vmatprep.subr.mxu0 0.0
  %328 = vmatpush1.msra.mxu0 0.0
  %329 = vmatprep.subr.mxu0 0.0
  %330 = vmatpush1.msra.mxu0 0.0
  %331 = vmatprep.subr.mxu0 0.0
  %332 = vmatpush1.msra.mxu0 0.0
  %333 = vmatprep.subr.mxu0 0.0
  %334 = vmatpush1.msra.mxu0 0.0
  %335 = vmatprep.subr.mxu0 0.0
  %336 = vmatpush1.msra.mxu0 0.0
  %337 = vmatprep.subr.mxu0 0.0
  %338 = vmatpush1.msra.mxu0 0.0
  %339 = vmatprep.mubr.f32.mxu0 0.0
  %340 = vmatmul.mubr.f32.gmra.mrb[0].mxu0 %v29
  %v341 = vpop.f32.mrb[0].mxu0
  %v342 = vadd.f32 0.0, %v341
  %v343 = vpop.f32.mrb[0].mxu0
  %344 = vdwg.mxu0
  %v345 = vmax.f32 %v108, %v271
  %v346 = vmax.f32 %v110, %v273
  %v347 = vmax.f32 %v179, %v342
  %s348 = scalar_lea.vmem %s0, 192
  %v349 = vld [vmem:[%s348] sm:$0xff]
  %v350 = vld [vmem:[%s348 + $0x8] sm:$0xff]
  %v351 = vld [vmem:[%s348 + $0x10] sm:$0xff]
  %v352 = vld [vmem:[%s348 + $0x18] sm:$0xff]
  %v353 = vld [vmem:[%s348 + $0x20] sm:$0xff]
  %v354 = vld [vmem:[%s348 + $0x28] sm:$0xff]
  %v355 = vld [vmem:[%s348 + $0x30] sm:$0xff]
  %v356 = vld [vmem:[%s348 + $0x38] sm:$0xff]
  %v357 = vld [vmem:[%s348 + $0x40] sm:$0xff]
  %v358 = vld [vmem:[%s348 + $0x48] sm:$0x1]
  %v359 = vld [vmem:[%s348 + $0x50] sm:$0x1]
  %v360 = vld [vmem:[%s348 + $0x58] sm:$0x1]
  %v362 = vsel %vm31, %v358, 0
  %v365 = vsel %vm31, %v359, 0
  %v368 = vsel %vm31, %v360, 0
  %370 = vmatprep.subr.mxu0 %v350
  %371 = vmatpush1.msra.mxu0 %v349
  %372 = vmatprep.subr.mxu0 %v353
  %373 = vmatpush1.msra.mxu0 %v352
  %374 = vmatprep.subr.mxu0 %v356
  %375 = vmatpush1.msra.mxu0 %v355
  %376 = vmatprep.subr.mxu0 %v365
  %377 = vmatpush1.msra.mxu0 %v362
  %378 = vmatprep.subr.mxu0 0.0
  %379 = vmatpush1.msra.mxu0 0.0
  %380 = vmatprep.subr.mxu0 0.0
  %381 = vmatpush1.msra.mxu0 0.0
  %382 = vmatprep.subr.mxu0 0.0
  %383 = vmatpush1.msra.mxu0 0.0
  %384 = vmatprep.subr.mxu0 0.0
  %385 = vmatpush1.msra.mxu0 0.0
  %386 = vmatprep.subr.mxu0 0.0
  %387 = vmatpush1.msra.mxu0 0.0
  %388 = vmatprep.subr.mxu0 0.0
  %389 = vmatpush1.msra.mxu0 0.0
  %390 = vmatprep.subr.mxu0 0.0
  %391 = vmatpush1.msra.mxu0 0.0
  %392 = vmatprep.subr.mxu0 0.0
  %393 = vmatpush1.msra.mxu0 0.0
  %394 = vmatprep.subr.mxu0 0.0
  %395 = vmatpush1.msra.mxu0 0.0
  %396 = vmatprep.subr.mxu0 0.0
  %397 = vmatpush1.msra.mxu0 0.0
  %398 = vmatprep.subr.mxu0 0.0
  %399 = vmatpush1.msra.mxu0 0.0
  %400 = vmatprep.subr.mxu0 0.0
  %401 = vmatpush1.msra.mxu0 0.0
  %402 = vmatprep.subr.mxu0 0.0
  %403 = vmatpush1.msra.mxu0 0.0
  %404 = vmatprep.subr.mxu0 0.0
  %405 = vmatpush1.msra.mxu0 0.0
  %406 = vmatprep.subr.mxu0 0.0
  %407 = vmatpush1.msra.mxu0 0.0
  %408 = vmatprep.subr.mxu0 0.0
  %409 = vmatpush1.msra.mxu0 0.0
  %410 = vmatprep.subr.mxu0 0.0
  %411 = vmatpush1.msra.mxu0 0.0
  %412 = vmatprep.subr.mxu0 0.0
  %413 = vmatpush1.msra.mxu0 0.0
  %414 = vmatprep.subr.mxu0 0.0
  %415 = vmatpush1.msra.mxu0 0.0
  %416 = vmatprep.subr.mxu0 0.0
  %417 = vmatpush1.msra.mxu0 0.0
  %418 = vmatprep.subr.mxu0 0.0
  %419 = vmatpush1.msra.mxu0 0.0
  %420 = vmatprep.subr.mxu0 0.0
  %421 = vmatpush1.msra.mxu0 0.0
  %422 = vmatprep.subr.mxu0 0.0
  %423 = vmatpush1.msra.mxu0 0.0
  %424 = vmatprep.subr.mxu0 0.0
  %425 = vmatpush1.msra.mxu0 0.0
  %426 = vmatprep.subr.mxu0 0.0
  %427 = vmatpush1.msra.mxu0 0.0
  %428 = vmatprep.subr.mxu0 0.0
  %429 = vmatpush1.msra.mxu0 0.0
  %430 = vmatprep.subr.mxu0 0.0
  %431 = vmatpush1.msra.mxu0 0.0
  %432 = vmatprep.subr.mxu0 0.0
  %433 = vmatpush1.msra.mxu0 0.0
  %434 = vmatprep.mubr.f32.mxu0 0.0
  %435 = vmatmul.mubr.f32.gmra.mrb[0].mxu0 %v29
  %v436 = vpop.f32.mrb[0].mxu0
  %v437 = vadd.f32 0.0, %v436
  %v438 = vpop.f32.mrb[0].mxu0
  %v439 = vadd.f32 0.0, %v438
  %440 = vdwg.mxu0
  %441 = vmatprep.subr.mxu0 0.0
  %442 = vmatpush1.msra.mxu0 %v351
  %443 = vmatprep.subr.mxu0 0.0
  %444 = vmatpush1.msra.mxu0 %v354
  %445 = vmatprep.subr.mxu0 0.0
  %446 = vmatpush1.msra.mxu0 %v357
  %447 = vmatprep.subr.mxu0 0.0
  %448 = vmatpush1.msra.mxu0 %v368
  %449 = vmatprep.subr.mxu0 0.0
  %450 = vmatpush1.msra.mxu0 0.0
  %451 = vmatprep.subr.mxu0 0.0
  %452 = vmatpush1.msra.mxu0 0.0
  %453 = vmatprep.subr.mxu0 0.0
  %454 = vmatpush1.msra.mxu0 0.0
  %455 = vmatprep.subr.mxu0 0.0
  %456 = vmatpush1.msra.mxu0 0.0
  %457 = vmatprep.subr.mxu0 0.0
  %458 = vmatpush1.msra.mxu0 0.0
  %459 = vmatprep.subr.mxu0 0.0
  %460 = vmatpush1.msra.mxu0 0.0
  %461 = vmatprep.subr.mxu0 0.0
  %462 = vmatpush1.msra.mxu0 0.0
  %463 = vmatprep.subr.mxu0 0.0
  %464 = vmatpush1.msra.mxu0 0.0
  %465 = vmatprep.subr.mxu0 0.0
  %466 = vmatpush1.msra.mxu0 0.0
  %467 = vmatprep.subr.mxu0 0.0
  %468 = vmatpush1.msra.mxu0 0.0
  %469 = vmatprep.subr.mxu0 0.0
  %470 = vmatpush1.msra.mxu0 0.0
  %471 = vmatprep.subr.mxu0 0.0
  %472 = vmatpush1.msra.mxu0 0.0
  %473 = vmatprep.subr.mxu0 0.0
  %474 = vmatpush1.msra.mxu0 0.0
  %475 = vmatprep.subr.mxu0 0.0
  %476 = vmatpush1.msra.mxu0 0.0
  %477 = vmatprep.subr.mxu0 0.0
  %478 = vmatpush1.msra.mxu0 0.0
  %479 = vmatprep.subr.mxu0 0.0
  %480 = vmatpush1.msra.mxu0 0.0
  %481 = vmatprep.subr.mxu0 0.0
  %482 = vmatpush1.msra.mxu0 0.0
  %483 = vmatprep.subr.mxu0 0.0
  %484 = vmatpush1.msra.mxu0 0.0
  %485 = vmatprep.subr.mxu0 0.0
  %486 = vmatpush1.msra.mxu0 0.0
  %487 = vmatprep.subr.mxu0 0.0
  %488 = vmatpush1.msra.mxu0 0.0
  %489 = vmatprep.subr.mxu0 0.0
  %490 = vmatpush1.msra.mxu0 0.0
  %491 = vmatprep.subr.mxu0 0.0
  %492 = vmatpush1.msra.mxu0 0.0
  %493 = vmatprep.subr.mxu0 0.0
  %494 = vmatpush1.msra.mxu0 0.0
  %495 = vmatprep.subr.mxu0 0.0
  %496 = vmatpush1.msra.mxu0 0.0
  %497 = vmatprep.subr.mxu0 0.0
  %498 = vmatpush1.msra.mxu0 0.0
  %499 = vmatprep.subr.mxu0 0.0
  %500 = vmatpush1.msra.mxu0 0.0
  %501 = vmatprep.subr.mxu0 0.0
  %502 = vmatpush1.msra.mxu0 0.0
  %503 = vmatprep.subr.mxu0 0.0
  %504 = vmatpush1.msra.mxu0 0.0
  %505 = vmatprep.mubr.f32.mxu0 0.0
  %506 = vmatmul.mubr.f32.gmra.mrb[0].mxu0 %v29
  %v507 = vpop.f32.mrb[0].mxu0
  %v508 = vadd.f32 0.0, %v507
  %v509 = vpop.f32.mrb[0].mxu0
  %510 = vdwg.mxu0
  %v511 = vmax.f32 %v345, %v437
  %v512 = vmax.f32 %v346, %v439
  %v513 = vmax.f32 %v347, %v508
  %s514 = scalar_lea.vmem %s0, 288
  %v515 = vld [vmem:[%s514] sm:$0xff]
  %v516 = vld [vmem:[%s514 + $0x8] sm:$0xff]
  %v517 = vld [vmem:[%s514 + $0x10] sm:$0xff]
  %v518 = vld [vmem:[%s514 + $0x18] sm:$0xff]
  %v519 = vld [vmem:[%s514 + $0x20] sm:$0xff]
  %v520 = vld [vmem:[%s514 + $0x28] sm:$0xff]
  %v521 = vld [vmem:[%s514 + $0x30] sm:$0xff]
  %v522 = vld [vmem:[%s514 + $0x38] sm:$0xff]
  %v523 = vld [vmem:[%s514 + $0x40] sm:$0xff]
  %v524 = vld [vmem:[%s514 + $0x48] sm:$0x1]
  %v525 = vld [vmem:[%s514 + $0x50] sm:$0x1]
  %v526 = vld [vmem:[%s514 + $0x58] sm:$0x1]
  %v528 = vsel %vm31, %v524, 0
  %v531 = vsel %vm31, %v525, 0
  %v534 = vsel %vm31, %v526, 0
  %536 = vmatprep.subr.mxu0 %v516
  %537 = vmatpush1.msra.mxu0 %v515
  %538 = vmatprep.subr.mxu0 %v519
  %539 = vmatpush1.msra.mxu0 %v518
  %540 = vmatprep.subr.mxu0 %v522
  %541 = vmatpush1.msra.mxu0 %v521
  %542 = vmatprep.subr.mxu0 %v531
  %543 = vmatpush1.msra.mxu0 %v528
  %544 = vmatprep.subr.mxu0 0.0
  %545 = vmatpush1.msra.mxu0 0.0
  %546 = vmatprep.subr.mxu0 0.0
  %547 = vmatpush1.msra.mxu0 0.0
  %548 = vmatprep.subr.mxu0 0.0
  %549 = vmatpush1.msra.mxu0 0.0
  %550 = vmatprep.subr.mxu0 0.0
  %551 = vmatpush1.msra.mxu0 0.0
  %552 = vmatprep.subr.mxu0 0.0
  %553 = vmatpush1.msra.mxu0 0.0
  %554 = vmatprep.subr.mxu0 0.0
  %555 = vmatpush1.msra.mxu0 0.0
  %556 = vmatprep.subr.mxu0 0.0
  %557 = vmatpush1.msra.mxu0 0.0
  %558 = vmatprep.subr.mxu0 0.0
  %559 = vmatpush1.msra.mxu0 0.0
  %560 = vmatprep.subr.mxu0 0.0
  %561 = vmatpush1.msra.mxu0 0.0
  %562 = vmatprep.subr.mxu0 0.0
  %563 = vmatpush1.msra.mxu0 0.0
  %564 = vmatprep.subr.mxu0 0.0
  %565 = vmatpush1.msra.mxu0 0.0
  %566 = vmatprep.subr.mxu0 0.0
  %567 = vmatpush1.msra.mxu0 0.0
  %568 = vmatprep.subr.mxu0 0.0
  %569 = vmatpush1.msra.mxu0 0.0
  %570 = vmatprep.subr.mxu0 0.0
  %571 = vmatpush1.msra.mxu0 0.0
  %572 = vmatprep.subr.mxu0 0.0
  %573 = vmatpush1.msra.mxu0 0.0
  %574 = vmatprep.subr.mxu0 0.0
  %575 = vmatpush1.msra.mxu0 0.0
  %576 = vmatprep.subr.mxu0 0.0
  %577 = vmatpush1.msra.mxu0 0.0
  %578 = vmatprep.subr.mxu0 0.0
  %579 = vmatpush1.msra.mxu0 0.0
  %580 = vmatprep.subr.mxu0 0.0
  %581 = vmatpush1.msra.mxu0 0.0
  %582 = vmatprep.subr.mxu0 0.0
  %583 = vmatpush1.msra.mxu0 0.0
  %584 = vmatprep.subr.mxu0 0.0
  %585 = vmatpush1.msra.mxu0 0.0
  %586 = vmatprep.subr.mxu0 0.0
  %587 = vmatpush1.msra.mxu0 0.0
  %588 = vmatprep.subr.mxu0 0.0
  %589 = vmatpush1.msra.mxu0 0.0
  %590 = vmatprep.subr.mxu0 0.0
  %591 = vmatpush1.msra.mxu0 0.0
  %592 = vmatprep.subr.mxu0 0.0
  %593 = vmatpush1.msra.mxu0 0.0
  %594 = vmatprep.subr.mxu0 0.0
  %595 = vmatpush1.msra.mxu0 0.0
  %596 = vmatprep.subr.mxu0 0.0
  %597 = vmatpush1.msra.mxu0 0.0
  %598 = vmatprep.subr.mxu0 0.0
  %599 = vmatpush1.msra.mxu0 0.0
  %600 = vmatprep.mubr.f32.mxu0 0.0
  %601 = vmatmul.mubr.f32.gmra.mrb[0].mxu0 %v29
  %v602 = vpop.f32.mrb[0].mxu0
  %v603 = vadd.f32 0.0, %v602
  %v604 = vpop.f32.mrb[0].mxu0
  %v605 = vadd.f32 0.0, %v604
  %606 = vdwg.mxu0
  %607 = vmatprep.subr.mxu0 0.0
  %608 = vmatpush1.msra.mxu0 %v517
  %609 = vmatprep.subr.mxu0 0.0
  %610 = vmatpush1.msra.mxu0 %v520
  %611 = vmatprep.subr.mxu0 0.0
  %612 = vmatpush1.msra.mxu0 %v523
  %613 = vmatprep.subr.mxu0 0.0
  %614 = vmatpush1.msra.mxu0 %v534
  %615 = vmatprep.subr.mxu0 0.0
  %616 = vmatpush1.msra.mxu0 0.0
  %617 = vmatprep.subr.mxu0 0.0
  %618 = vmatpush1.msra.mxu0 0.0
  %619 = vmatprep.subr.mxu0 0.0
  %620 = vmatpush1.msra.mxu0 0.0
  %621 = vmatprep.subr.mxu0 0.0
  %622 = vmatpush1.msra.mxu0 0.0
  %623 = vmatprep.subr.mxu0 0.0
  %624 = vmatpush1.msra.mxu0 0.0
  %625 = vmatprep.subr.mxu0 0.0
  %626 = vmatpush1.msra.mxu0 0.0
  %627 = vmatprep.subr.mxu0 0.0
  %628 = vmatpush1.msra.mxu0 0.0
  %629 = vmatprep.subr.mxu0 0.0
  %630 = vmatpush1.msra.mxu0 0.0
  %631 = vmatprep.subr.mxu0 0.0
  %632 = vmatpush1.msra.mxu0 0.0
  %633 = vmatprep.subr.mxu0 0.0
  %634 = vmatpush1.msra.mxu0 0.0
  %635 = vmatprep.subr.mxu0 0.0
  %636 = vmatpush1.msra.mxu0 0.0
  %637 = vmatprep.subr.mxu0 0.0
  %638 = vmatpush1.msra.mxu0 0.0
  %639 = vmatprep.subr.mxu0 0.0
  %640 = vmatpush1.msra.mxu0 0.0
  %641 = vmatprep.subr.mxu0 0.0
  %642 = vmatpush1.msra.mxu0 0.0
  %643 = vmatprep.subr.mxu0 0.0
  %644 = vmatpush1.msra.mxu0 0.0
  %645 = vmatprep.subr.mxu0 0.0
  %646 = vmatpush1.msra.mxu0 0.0
  %647 = vmatprep.subr.mxu0 0.0
  %648 = vmatpush1.msra.mxu0 0.0
  %649 = vmatprep.subr.mxu0 0.0
  %650 = vmatpush1.msra.mxu0 0.0
  %651 = vmatprep.subr.mxu0 0.0
  %652 = vmatpush1.msra.mxu0 0.0
  %653 = vmatprep.subr.mxu0 0.0
  %654 = vmatpush1.msra.mxu0 0.0
  %655 = vmatprep.subr.mxu0 0.0
  %656 = vmatpush1.msra.mxu0 0.0
  %657 = vmatprep.subr.mxu0 0.0
  %658 = vmatpush1.msra.mxu0 0.0
  %659 = vmatprep.subr.mxu0 0.0
  %660 = vmatpush1.msra.mxu0 0.0
  %661 = vmatprep.subr.mxu0 0.0
  %662 = vmatpush1.msra.mxu0 0.0
  %663 = vmatprep.subr.mxu0 0.0
  %664 = vmatpush1.msra.mxu0 0.0
  %665 = vmatprep.subr.mxu0 0.0
  %666 = vmatpush1.msra.mxu0 0.0
  %667 = vmatprep.subr.mxu0 0.0
  %668 = vmatpush1.msra.mxu0 0.0
  %669 = vmatprep.subr.mxu0 0.0
  %670 = vmatpush1.msra.mxu0 0.0
  %671 = vmatprep.mubr.f32.mxu0 0.0
  %672 = vmatmul.mubr.f32.gmra.mrb[0].mxu0 %v29
  %v673 = vpop.f32.mrb[0].mxu0
  %v674 = vadd.f32 0.0, %v673
  %v675 = vpop.f32.mrb[0].mxu0
  %676 = vdwg.mxu0
  %v677 = vmax.f32 %v511, %v603
  %v678 = vmax.f32 %v512, %v605
  %v679 = vmax.f32 %v513, %v674
  %v680 = vld [vmem:[%s2] sm:$0x3f]
  %682 = vset.pattern.permute.xlu0 0
  %683 = vperm.xlu0 %682, %v680
  %v684 = vpop.permute.xlu0 %683
  %v686 = vadd.f32 %v677, %v684
  %v687 = vadd.f32 %v678, %v684
  %v688 = vadd.f32 %v679, %v684
  %v689 = vmax.f32 %v686, 0.0
  %v690 = vmax.f32 %v687, 0.0
  %v691 = vmax.f32 %v688, 0.0
  %692 = vst [vmem:[%s3] sm:$0x3f] %v689
  %693 = vst [vmem:[%s3 + $0x8] sm:$0x3f] %v690
  %694 = vst [vmem:[%s3 + $0x10] sm:$0x3f] %v691
  // Predicated region
  $region14: #{net_forward.3} parent=0 // pred_check
    _
  $region15: #{net_forward.3} parent=0 // pred_check_branch
    %696 = sbr.rel (0) target = $region17
  $region16: #{net_forward.3} parent=0 // pred_region
    _
  $region17: #{net_forward.3} parent=0 // pred_fallthru
    _
  // Predicated region
  $region18: #{net_forward.3} parent=0 // pred_check
    _
  $region19: #{net_forward.3} parent=0 // pred_check_branch
    %698 = sbr.rel (0) target = $region21
  $region20: #{net_forward.3} parent=0 // pred_region
    _
  $region21: #{net_forward.3} parent=0 // pred_fallthru
    _

// kernel: net_forward.4
$region0: #{net_forward.4}
  #allocation0 [shape = 'u32[]', space=smem, size = 0x4, offset = 0x4, fixed_abs, tag = 'smem constant byte address 0x4 - core index']
  #allocation1 [shape = 'u32[144,128]{1,0:T(1,128)}', space=vmem, size = 0x12000, scoped, tag = 'internal scratch']
  %s0 = inlined_call_operand.vmem [shape: f32[4,150,128], index: 0, kind: input, shape index: {}]
  %s1 = inlined_call_operand.vmem [shape: f32[16,150], index: 1, kind: input, shape index: {}]
  %s2 = inlined_call_operand.vmem [shape: f32[16,1], index: 2, kind: input, shape index: {}]
  %s3 = inlined_call_operand.vmem [shape: f32[16,128], index: 3, kind: output, shape index: {}]
  %s4 = sld [smem:[#allocation0]]
  $region22: #{net_forward.4} parent=0
    _
  %s6 = ssub.s32 1, %s4
  %s7 = scalar_select 0, %s6, %s4
  // Predicated region
  $region2: #{net_forward.4} parent=0 // pred_check
    _
  $region3: #{net_forward.4} parent=0 // pred_check_branch
    %9 = sbr.rel (0) target = $region5
  $region4: #{net_forward.4} parent=0 // pred_region
    _
  $region5: #{net_forward.4} parent=0 // pred_fallthru
    _
  // Predicated region
  $region6: #{net_forward.4} parent=0 // pred_check
    _
  $region7: #{net_forward.4} parent=0 // pred_check_branch
    %11 = sbr.rel (0) target = $region9
  $region8: #{net_forward.4} parent=0 // pred_region
    _
  $region9: #{net_forward.4} parent=0 // pred_fallthru
    _
  // Predicated region
  $region10: #{net_forward.4} parent=0 // pred_check
    _
  $region11: #{net_forward.4} parent=0 // pred_check_branch
    %13 = sbr.rel (0) target = $region13
  $region12: #{net_forward.4} parent=0 // pred_region
    _
  $region13: #{net_forward.4} parent=0 // pred_fallthru
    _
  %v14 = vld [vmem:[%s1] sm:$0xff]
  %v15 = vld [vmem:[%s1 + $0x8] sm:$0xff]
  %v16 = vld [vmem:[%s1 + $0x10] sm:$0xff]
  %v17 = vld [vmem:[%s1 + $0x18] sm:$0xff]
  %v18 = vld [vmem:[%s0] sm:$0xff]
  %v19 = vld [vmem:[%s0 + $0x8] sm:$0xff]
  %v20 = vld [vmem:[%s0 + $0x10] sm:$0xff]
  %v21 = vld [vmem:[%s0 + $0x18] sm:$0xff]
  %v22 = vld [vmem:[%s0 + $0x20] sm:$0xff]
  %v23 = vld [vmem:[%s0 + $0x28] sm:$0xff]
  %v24 = vld [vmem:[%s0 + $0x30] sm:$0xff]
  %v25 = vld [vmem:[%s0 + $0x38] sm:$0xff]
  %v26 = vld [vmem:[%s0 + $0x40] sm:$0xff]
  %v27 = vld [vmem:[%s0 + $0x48] sm:$0xff]
  %v28 = vld [vmem:[%s0 + $0x50] sm:$0xff]
  %v29 = vld [vmem:[%s0 + $0x58] sm:$0xff]
  %v30 = vld [vmem:[%s0 + $0x60] sm:$0xff]
  %v31 = vld [vmem:[%s0 + $0x68] sm:$0xff]
  %v32 = vld [vmem:[%s0 + $0x70] sm:$0xff]
  %v33 = vld [vmem:[%s0 + $0x78] sm:$0xff]
  %v34 = vld [vmem:[%s0 + $0x80] sm:$0xff]
  %v35 = vld [vmem:[%s0 + $0x88] sm:$0xff]
  %v36 = vld [vmem:[%s0 + $0x90] sm:$0x3f]
  %vm37 = vcmask 179200
  %v39 = vsel %vm37, %v15, 0
  %v42 = vsel %vm37, %v17, 0
  %vm44 = vcmask 1045504
  %v46 = vsel %vm44, %v36, 0
  %48 = vmatprep.subr.mxu0 0.0
  %49 = vmatpush1.msra.mxu0 %v18
  %50 = vmatprep.subr.mxu0 0.0
  %51 = vmatpush1.msra.mxu0 %v19
  %52 = vmatprep.subr.mxu0 0.0
  %53 = vmatpush1.msra.mxu0 %v20
  %54 = vmatprep.subr.mxu0 0.0
  %55 = vmatpush1.msra.mxu0 %v21
  %56 = vmatprep.subr.mxu0 0.0
  %57 = vmatpush1.msra.mxu0 %v22
  %58 = vmatprep.subr.mxu0 0.0
  %59 = vmatpush1.msra.mxu0 %v23
  %60 = vmatprep.subr.mxu0 0.0
  %61 = vmatpush1.msra.mxu0 %v24
  %62 = vmatprep.subr.mxu0 0.0
  %63 = vmatpush1.msra.mxu0 %v25
  %64 = vmatprep.subr.mxu0 0.0
  %65 = vmatpush1.msra.mxu0 %v26
  %66 = vmatprep.subr.mxu0 0.0
  %67 = vmatpush1.msra.mxu0 %v27
  %68 = vmatprep.subr.mxu0 0.0
  %69 = vmatpush1.msra.mxu0 %v28
  %70 = vmatprep.subr.mxu0 0.0
  %71 = vmatpush1.msra.mxu0 %v29
  %72 = vmatprep.subr.mxu0 0.0
  %73 = vmatpush1.msra.mxu0 %v30
  %74 = vmatprep.subr.mxu0 0.0
  %75 = vmatpush1.msra.mxu0 %v31
  %76 = vmatprep.subr.mxu0 0.0
  %77 = vmatpush1.msra.mxu0 %v32
  %78 = vmatprep.subr.mxu0 0.0
  %79 = vmatpush1.msra.mxu0 %v33
  %80 = vmatprep.subr.mxu0 0.0
  %81 = vmatpush1.msra.mxu0 %v34
  %82 = vmatprep.subr.mxu0 0.0
  %83 = vmatpush1.msra.mxu0 %v35
  %84 = vmatprep.subr.mxu0 0.0
  %85 = vmatpush1.msra.mxu0 %v46
  %86 = vmatprep.subr.mxu0 0.0
  %87 = vmatpush1.msra.mxu0 0.0
  %88 = vmatprep.subr.mxu0 0.0
  %89 = vmatpush1.msra.mxu0 0.0
  %90 = vmatprep.subr.mxu0 0.0
  %91 = vmatpush1.msra.mxu0 0.0
  %92 = vmatprep.subr.mxu0 0.0
  %93 = vmatpush1.msra.mxu0 0.0
  %94 = vmatprep.subr.mxu0 0.0
  %95 = vmatpush1.msra.mxu0 0.0
  %96 = vmatprep.subr.mxu0 0.0
  %97 = vmatpush1.msra.mxu0 0.0
  %98 = vmatprep.subr.mxu0 0.0
  %99 = vmatpush1.msra.mxu0 0.0
  %100 = vmatprep.subr.mxu0 0.0
  %101 = vmatpush1.msra.mxu0 0.0
  %102 = vmatprep.subr.mxu0 0.0
  %103 = vmatpush1.msra.mxu0 0.0
  %104 = vmatprep.subr.mxu0 0.0
  %105 = vmatpush1.msra.mxu0 0.0
  %106 = vmatprep.subr.mxu0 0.0
  %107 = vmatpush1.msra.mxu0 0.0
  %108 = vmatprep.subr.mxu0 0.0
  %109 = vmatpush1.msra.mxu0 0.0
  %110 = vmatprep.subr.mxu0 0.0
  %111 = vmatpush1.msra.mxu0 0.0
  %112 = vmatprep.mubr.f32.mxu0 %v39
  %113 = vmatmul.mubr.f32.gmra.mrb[0].mxu0 %v14
  %v114 = vpop.f32.mrb[0].mxu0
  %v115 = vadd.f32 0.0, %v114
  %v116 = vpop.f32.mrb[0].mxu0
  %117 = vmatprep.mubr.f32.mxu0 %v42
  %118 = vmatmul.mubr.f32.gmra.mrb[0].mxu0 %v16
  %v119 = vpop.f32.mrb[0].mxu0
  %v120 = vadd.f32 0.0, %v119
  %v121 = vpop.f32.mrb[0].mxu0
  %122 = vdwg.mxu0
  %s123 = scalar_lea.vmem %s0, 152
  %v124 = vld [vmem:[%s123] sm:$0xff]
  %v125 = vld [vmem:[%s123 + $0x8] sm:$0xff]
  %v126 = vld [vmem:[%s123 + $0x10] sm:$0xff]
  %v127 = vld [vmem:[%s123 + $0x18] sm:$0xff]
  %v128 = vld [vmem:[%s123 + $0x20] sm:$0xff]
  %v129 = vld [vmem:[%s123 + $0x28] sm:$0xff]
  %v130 = vld [vmem:[%s123 + $0x30] sm:$0xff]
  %v131 = vld [vmem:[%s123 + $0x38] sm:$0xff]
  %v132 = vld [vmem:[%s123 + $0x40] sm:$0xff]
  %v133 = vld [vmem:[%s123 + $0x48] sm:$0xff]
  %v134 = vld [vmem:[%s123 + $0x50] sm:$0xff]
  %v135 = vld [vmem:[%s123 + $0x58] sm:$0xff]
  %v136 = vld [vmem:[%s123 + $0x60] sm:$0xff]
  %v137 = vld [vmem:[%s123 + $0x68] sm:$0xff]
  %v138 = vld [vmem:[%s123 + $0x70] sm:$0xff]
  %v139 = vld [vmem:[%s123 + $0x78] sm:$0xff]
  %v140 = vld [vmem:[%s123 + $0x80] sm:$0xff]
  %v141 = vld [vmem:[%s123 + $0x88] sm:$0xff]
  %v142 = vld [vmem:[%s123 + $0x90] sm:$0x3f]
  %v144 = vsel %vm44, %v142, 0
  %146 = vmatprep.subr.mxu0 0.0
  %147 = vmatpush1.msra.mxu0 %v124
  %148 = vmatprep.subr.mxu0 0.0
  %149 = vmatpush1.msra.mxu0 %v125
  %150 = vmatprep.subr.mxu0 0.0
  %151 = vmatpush1.msra.mxu0 %v126
  %152 = vmatprep.subr.mxu0 0.0
  %153 = vmatpush1.msra.mxu0 %v127
  %154 = vmatprep.subr.mxu0 0.0
  %155 = vmatpush1.msra.mxu0 %v128
  %156 = vmatprep.subr.mxu0 0.0
  %157 = vmatpush1.msra.mxu0 %v129
  %158 = vmatprep.subr.mxu0 0.0
  %159 = vmatpush1.msra.mxu0 %v130
  %160 = vmatprep.subr.mxu0 0.0
  %161 = vmatpush1.msra.mxu0 %v131
  %162 = vmatprep.subr.mxu0 0.0
  %163 = vmatpush1.msra.mxu0 %v132
  %164 = vmatprep.subr.mxu0 0.0
  %165 = vmatpush1.msra.mxu0 %v133
  %166 = vmatprep.subr.mxu0 0.0
  %167 = vmatpush1.msra.mxu0 %v134
  %168 = vmatprep.subr.mxu0 0.0
  %169 = vmatpush1.msra.mxu0 %v135
  %170 = vmatprep.subr.mxu0 0.0
  %171 = vmatpush1.msra.mxu0 %v136
  %172 = vmatprep.subr.mxu0 0.0
  %173 = vmatpush1.msra.mxu0 %v137
  %174 = vmatprep.subr.mxu0 0.0
  %175 = vmatpush1.msra.mxu0 %v138
  %176 = vmatprep.subr.mxu0 0.0
  %177 = vmatpush1.msra.mxu0 %v139
  %178 = vmatprep.subr.mxu0 0.0
  %179 = vmatpush1.msra.mxu0 %v140
  %180 = vmatprep.subr.mxu0 0.0
  %181 = vmatpush1.msra.mxu0 %v141
  %182 = vmatprep.subr.mxu0 0.0
  %183 = vmatpush1.msra.mxu0 %v144
  %184 = vmatprep.subr.mxu0 0.0
  %185 = vmatpush1.msra.mxu0 0.0
  %186 = vmatprep.subr.mxu0 0.0
  %187 = vmatpush1.msra.mxu0 0.0
  %188 = vmatprep.subr.mxu0 0.0
  %189 = vmatpush1.msra.mxu0 0.0
  %190 = vmatprep.subr.mxu0 0.0
  %191 = vmatpush1.msra.mxu0 0.0
  %192 = vmatprep.subr.mxu0 0.0
  %193 = vmatpush1.msra.mxu0 0.0
  %194 = vmatprep.subr.mxu0 0.0
  %195 = vmatpush1.msra.mxu0 0.0
  %196 = vmatprep.subr.mxu0 0.0
  %197 = vmatpush1.msra.mxu0 0.0
  %198 = vmatprep.subr.mxu0 0.0
  %199 = vmatpush1.msra.mxu0 0.0
  %200 = vmatprep.subr.mxu0 0.0
  %201 = vmatpush1.msra.mxu0 0.0
  %202 = vmatprep.subr.mxu0 0.0
  %203 = vmatpush1.msra.mxu0 0.0
  %204 = vmatprep.subr.mxu0 0.0
  %205 = vmatpush1.msra.mxu0 0.0
  %206 = vmatprep.subr.mxu0 0.0
  %207 = vmatpush1.msra.mxu0 0.0
  %208 = vmatprep.subr.mxu0 0.0
  %209 = vmatpush1.msra.mxu0 0.0
  %210 = vmatprep.mubr.f32.mxu0 %v39
  %211 = vmatmul.mubr.f32.gmra.mrb[0].mxu0 %v14
  %v212 = vpop.f32.mrb[0].mxu0
  %v213 = vadd.f32 0.0, %v212
  %v214 = vpop.f32.mrb[0].mxu0
  %215 = vmatprep.mubr.f32.mxu0 %v42
  %216 = vmatmul.mubr.f32.gmra.mrb[0].mxu0 %v16
  %v217 = vpop.f32.mrb[0].mxu0
  %v218 = vadd.f32 0.0, %v217
  %v219 = vpop.f32.mrb[0].mxu0
  %220 = vdwg.mxu0
  %v221 = vmax.f32 %v115, %v213
  %v222 = vmax.f32 %v120, %v218
  %s223 = scalar_lea.vmem %s0, 304
  %v224 = vld [vmem:[%s223] sm:$0xff]
  %v225 = vld [vmem:[%s223 + $0x8] sm:$0xff]
  %v226 = vld [vmem:[%s223 + $0x10] sm:$0xff]
  %v227 = vld [vmem:[%s223 + $0x18] sm:$0xff]
  %v228 = vld [vmem:[%s223 + $0x20] sm:$0xff]
  %v229 = vld [vmem:[%s223 + $0x28] sm:$0xff]
  %v230 = vld [vmem:[%s223 + $0x30] sm:$0xff]
  %v231 = vld [vmem:[%s223 + $0x38] sm:$0xff]
  %v232 = vld [vmem:[%s223 + $0x40] sm:$0xff]
  %v233 = vld [vmem:[%s223 + $0x48] sm:$0xff]
  %v234 = vld [vmem:[%s223 + $0x50] sm:$0xff]
  %v235 = vld [vmem:[%s223 + $0x58] sm:$0xff]
  %v236 = vld [vmem:[%s223 + $0x60] sm:$0xff]
  %v237 = vld [vmem:[%s223 + $0x68] sm:$0xff]
  %v238 = vld [vmem:[%s223 + $0x70] sm:$0xff]
  %v239 = vld [vmem:[%s223 + $0x78] sm:$0xff]
  %v240 = vld [vmem:[%s223 + $0x80] sm:$0xff]
  %v241 = vld [vmem:[%s223 + $0x88] sm:$0xff]
  %v242 = vld [vmem:[%s223 + $0x90] sm:$0x3f]
  %v244 = vsel %vm44, %v242, 0
  %246 = vmatprep.subr.mxu0 0.0
  %247 = vmatpush1.msra.mxu0 %v224
  %248 = vmatprep.subr.mxu0 0.0
  %249 = vmatpush1.msra.mxu0 %v225
  %250 = vmatprep.subr.mxu0 0.0
  %251 = vmatpush1.msra.mxu0 %v226
  %252 = vmatprep.subr.mxu0 0.0
  %253 = vmatpush1.msra.mxu0 %v227
  %254 = vmatprep.subr.mxu0 0.0
  %255 = vmatpush1.msra.mxu0 %v228
  %256 = vmatprep.subr.mxu0 0.0
  %257 = vmatpush1.msra.mxu0 %v229
  %258 = vmatprep.subr.mxu0 0.0
  %259 = vmatpush1.msra.mxu0 %v230
  %260 = vmatprep.subr.mxu0 0.0
  %261 = vmatpush1.msra.mxu0 %v231
  %262 = vmatprep.subr.mxu0 0.0
  %263 = vmatpush1.msra.mxu0 %v232
  %264 = vmatprep.subr.mxu0 0.0
  %265 = vmatpush1.msra.mxu0 %v233
  %266 = vmatprep.subr.mxu0 0.0
  %267 = vmatpush1.msra.mxu0 %v234
  %268 = vmatprep.subr.mxu0 0.0
  %269 = vmatpush1.msra.mxu0 %v235
  %270 = vmatprep.subr.mxu0 0.0
  %271 = vmatpush1.msra.mxu0 %v236
  %272 = vmatprep.subr.mxu0 0.0
  %273 = vmatpush1.msra.mxu0 %v237
  %274 = vmatprep.subr.mxu0 0.0
  %275 = vmatpush1.msra.mxu0 %v238
  %276 = vmatprep.subr.mxu0 0.0
  %277 = vmatpush1.msra.mxu0 %v239
  %278 = vmatprep.subr.mxu0 0.0
  %279 = vmatpush1.msra.mxu0 %v240
  %280 = vmatprep.subr.mxu0 0.0
  %281 = vmatpush1.msra.mxu0 %v241
  %282 = vmatprep.subr.mxu0 0.0
  %283 = vmatpush1.msra.mxu0 %v244
  %284 = vmatprep.subr.mxu0 0.0
  %285 = vmatpush1.msra.mxu0 0.0
  %286 = vmatprep.subr.mxu0 0.0
  %287 = vmatpush1.msra.mxu0 0.0
  %288 = vmatprep.subr.mxu0 0.0
  %289 = vmatpush1.msra.mxu0 0.0
  %290 = vmatprep.subr.mxu0 0.0
  %291 = vmatpush1.msra.mxu0 0.0
  %292 = vmatprep.subr.mxu0 0.0
  %293 = vmatpush1.msra.mxu0 0.0
  %294 = vmatprep.subr.mxu0 0.0
  %295 = vmatpush1.msra.mxu0 0.0
  %296 = vmatprep.subr.mxu0 0.0
  %297 = vmatpush1.msra.mxu0 0.0
  %298 = vmatprep.subr.mxu0 0.0
  %299 = vmatpush1.msra.mxu0 0.0
  %300 = vmatprep.subr.mxu0 0.0
  %301 = vmatpush1.msra.mxu0 0.0
  %302 = vmatprep.subr.mxu0 0.0
  %303 = vmatpush1.msra.mxu0 0.0
  %304 = vmatprep.subr.mxu0 0.0
  %305 = vmatpush1.msra.mxu0 0.0
  %306 = vmatprep.subr.mxu0 0.0
  %307 = vmatpush1.msra.mxu0 0.0
  %308 = vmatprep.subr.mxu0 0.0
  %309 = vmatpush1.msra.mxu0 0.0
  %310 = vmatprep.mubr.f32.mxu0 %v39
  %311 = vmatmul.mubr.f32.gmra.mrb[0].mxu0 %v14
  %v312 = vpop.f32.mrb[0].mxu0
  %v313 = vadd.f32 0.0, %v312
  %v314 = vpop.f32.mrb[0].mxu0
  %315 = vmatprep.mubr.f32.mxu0 %v42
  %316 = vmatmul.mubr.f32.gmra.mrb[0].mxu0 %v16
  %v317 = vpop.f32.mrb[0].mxu0
  %v318 = vadd.f32 0.0, %v317
  %v319 = vpop.f32.mrb[0].mxu0
  %320 = vdwg.mxu0
  %v321 = vmax.f32 %v221, %v313
  %v322 = vmax.f32 %v222, %v318
  %s323 = scalar_lea.vmem %s0, 456
  %v324 = vld [vmem:[%s323] sm:$0xff]
  %v325 = vld [vmem:[%s323 + $0x8] sm:$0xff]
  %v326 = vld [vmem:[%s323 + $0x10] sm:$0xff]
  %v327 = vld [vmem:[%s323 + $0x18] sm:$0xff]
  %v328 = vld [vmem:[%s323 + $0x20] sm:$0xff]
  %v329 = vld [vmem:[%s323 + $0x28] sm:$0xff]
  %v330 = vld [vmem:[%s323 + $0x30] sm:$0xff]
  %v331 = vld [vmem:[%s323 + $0x38] sm:$0xff]
  %v332 = vld [vmem:[%s323 + $0x40] sm:$0xff]
  %v333 = vld [vmem:[%s323 + $0x48] sm:$0xff]
  %v334 = vld [vmem:[%s323 + $0x50] sm:$0xff]
  %v335 = vld [vmem:[%s323 + $0x58] sm:$0xff]
  %v336 = vld [vmem:[%s323 + $0x60] sm:$0xff]
  %v337 = vld [vmem:[%s323 + $0x68] sm:$0xff]
  %v338 = vld [vmem:[%s323 + $0x70] sm:$0xff]
  %v339 = vld [vmem:[%s323 + $0x78] sm:$0xff]
  %v340 = vld [vmem:[%s323 + $0x80] sm:$0xff]
  %v341 = vld [vmem:[%s323 + $0x88] sm:$0xff]
  %v342 = vld [vmem:[%s323 + $0x90] sm:$0x3f]
  %v344 = vsel %vm44, %v342, 0
  %346 = vmatprep.subr.mxu0 0.0
  %347 = vmatpush1.msra.mxu0 %v324
  %348 = vmatprep.subr.mxu0 0.0
  %349 = vmatpush1.msra.mxu0 %v325
  %350 = vmatprep.subr.mxu0 0.0
  %351 = vmatpush1.msra.mxu0 %v326
  %352 = vmatprep.subr.mxu0 0.0
  %353 = vmatpush1.msra.mxu0 %v327
  %354 = vmatprep.subr.mxu0 0.0
  %355 = vmatpush1.msra.mxu0 %v328
  %356 = vmatprep.subr.mxu0 0.0
  %357 = vmatpush1.msra.mxu0 %v329
  %358 = vmatprep.subr.mxu0 0.0
  %359 = vmatpush1.msra.mxu0 %v330
  %360 = vmatprep.subr.mxu0 0.0
  %361 = vmatpush1.msra.mxu0 %v331
  %362 = vmatprep.subr.mxu0 0.0
  %363 = vmatpush1.msra.mxu0 %v332
  %364 = vmatprep.subr.mxu0 0.0
  %365 = vmatpush1.msra.mxu0 %v333
  %366 = vmatprep.subr.mxu0 0.0
  %367 = vmatpush1.msra.mxu0 %v334
  %368 = vmatprep.subr.mxu0 0.0
  %369 = vmatpush1.msra.mxu0 %v335
  %370 = vmatprep.subr.mxu0 0.0
  %371 = vmatpush1.msra.mxu0 %v336
  %372 = vmatprep.subr.mxu0 0.0
  %373 = vmatpush1.msra.mxu0 %v337
  %374 = vmatprep.subr.mxu0 0.0
  %375 = vmatpush1.msra.mxu0 %v338
  %376 = vmatprep.subr.mxu0 0.0
  %377 = vmatpush1.msra.mxu0 %v339
  %378 = vmatprep.subr.mxu0 0.0
  %379 = vmatpush1.msra.mxu0 %v340
  %380 = vmatprep.subr.mxu0 0.0
  %381 = vmatpush1.msra.mxu0 %v341
  %382 = vmatprep.subr.mxu0 0.0
  %383 = vmatpush1.msra.mxu0 %v344
  %384 = vmatprep.subr.mxu0 0.0
  %385 = vmatpush1.msra.mxu0 0.0
  %386 = vmatprep.subr.mxu0 0.0
  %387 = vmatpush1.msra.mxu0 0.0
  %388 = vmatprep.subr.mxu0 0.0
  %389 = vmatpush1.msra.mxu0 0.0
  %390 = vmatprep.subr.mxu0 0.0
  %391 = vmatpush1.msra.mxu0 0.0
  %392 = vmatprep.subr.mxu0 0.0
  %393 = vmatpush1.msra.mxu0 0.0
  %394 = vmatprep.subr.mxu0 0.0
  %395 = vmatpush1.msra.mxu0 0.0
  %396 = vmatprep.subr.mxu0 0.0
  %397 = vmatpush1.msra.mxu0 0.0
  %398 = vmatprep.subr.mxu0 0.0
  %399 = vmatpush1.msra.mxu0 0.0
  %400 = vmatprep.subr.mxu0 0.0
  %401 = vmatpush1.msra.mxu0 0.0
  %402 = vmatprep.subr.mxu0 0.0
  %403 = vmatpush1.msra.mxu0 0.0
  %404 = vmatprep.subr.mxu0 0.0
  %405 = vmatpush1.msra.mxu0 0.0
  %406 = vmatprep.subr.mxu0 0.0
  %407 = vmatpush1.msra.mxu0 0.0
  %408 = vmatprep.subr.mxu0 0.0
  %409 = vmatpush1.msra.mxu0 0.0
  %410 = vmatprep.mubr.f32.mxu0 %v39
  %411 = vmatmul.mubr.f32.gmra.mrb[0].mxu0 %v14
  %v412 = vpop.f32.mrb[0].mxu0
  %v413 = vadd.f32 0.0, %v412
  %v414 = vpop.f32.mrb[0].mxu0
  %415 = vmatprep.mubr.f32.mxu0 %v42
  %416 = vmatmul.mubr.f32.gmra.mrb[0].mxu0 %v16
  %v417 = vpop.f32.mrb[0].mxu0
  %v418 = vadd.f32 0.0, %v417
  %v419 = vpop.f32.mrb[0].mxu0
  %420 = vdwg.mxu0
  %v421 = vmax.f32 %v321, %v413
  %v422 = vmax.f32 %v322, %v418
  %v423 = vld [vmem:[%s2] sm:$0xff]
  %v424 = vld [vmem:[%s2 + $0x8] sm:$0xff]
  %426 = vset.pattern.permute.xlu0 0
  %427 = vperm.xlu0 %426, %v423
  %v428 = vpop.permute.xlu0 %427
  %431 = vset.pattern.permute.xlu0 0
  %432 = vperm.xlu0 %431, %v424
  %v433 = vpop.permute.xlu0 %432
  %v435 = vadd.f32 %v421, %v428
  %v436 = vadd.f32 %v422, %v433
  %v437 = vmax.f32 %v435, 0.0
  %v438 = vmax.f32 %v436, 0.0
  %439 = vst [vmem:[%s3] sm:$0xff] %v437
  %440 = vst [vmem:[%s3 + $0x8] sm:$0xff] %v438
  // Predicated region
  $region14: #{net_forward.4} parent=0 // pred_check
    _
  $region15: #{net_forward.4} parent=0 // pred_check_branch
    %442 = sbr.rel (0) target = $region17
  $region16: #{net_forward.4} parent=0 // pred_region
    _
  $region17: #{net_forward.4} parent=0 // pred_fallthru
    _
  // Predicated region
  $region18: #{net_forward.4} parent=0 // pred_check
    _
  $region19: #{net_forward.4} parent=0 // pred_check_branch
    %444 = sbr.rel (0) target = $region21
  $region20: #{net_forward.4} parent=0 // pred_region
    _
  $region21: #{net_forward.4} parent=0 // pred_fallthru
    _

// kernel: net_forward.5
$region0: #{net_forward.5}
  #allocation0 [shape = 'u32[]', space=smem, size = 0x4, offset = 0x4, fixed_abs, tag = 'smem constant byte address 0x4 - core index']
  #allocation1 [shape = 'u32[144,128]{1,0:T(1,128)}', space=vmem, size = 0x12000, scoped, tag = 'internal scratch']
  %s0 = inlined_call_operand.vmem [shape: f32[256,128], index: 0, kind: input, shape index: {}]
  %s1 = inlined_call_operand.vmem [shape: f32[128,256], index: 1, kind: input, shape index: {}]
  %s2 = inlined_call_operand.vmem [shape: f32[128,1], index: 2, kind: input, shape index: {}]
  %s3 = inlined_call_operand.vmem [shape: f32[128,128], index: 3, kind: input, shape index: {}]
  %s4 = inlined_call_operand.vmem [shape: f32[128,1], index: 4, kind: input, shape index: {}]
  %s5 = inlined_call_operand.vmem [shape: f32[10,128], index: 5, kind: input, shape index: {}]
  %s6 = inlined_call_operand.vmem [shape: f32[10,1], index: 6, kind: input, shape index: {}]
  %s7 = inlined_call_operand.vmem [shape: f32[10,128], index: 7, kind: output, shape index: {}]
  %s8 = sld [smem:[#allocation0]]
  $region38: #{net_forward.5} parent=0
    _
  %s10 = ssub.s32 1, %s8
  %s11 = scalar_select 0, %s10, %s8
  // Predicated region
  $region2: #{net_forward.5} parent=0 // pred_check
    _
  $region3: #{net_forward.5} parent=0 // pred_check_branch
    %13 = sbr.rel (0) target = $region5
  $region4: #{net_forward.5} parent=0 // pred_region
    _
  $region5: #{net_forward.5} parent=0 // pred_fallthru
    _
  // Predicated region
  $region6: #{net_forward.5} parent=0 // pred_check
    _
  $region7: #{net_forward.5} parent=0 // pred_check_branch
    %15 = sbr.rel (0) target = $region9
  $region8: #{net_forward.5} parent=0 // pred_region
    _
  $region9: #{net_forward.5} parent=0 // pred_fallthru
    _
  // Predicated region
  $region10: #{net_forward.5} parent=0 // pred_check
    _
  $region11: #{net_forward.5} parent=0 // pred_check_branch
    %17 = sbr.rel (0) target = $region13
  $region12: #{net_forward.5} parent=0 // pred_region
    _
  $region13: #{net_forward.5} parent=0 // pred_fallthru
    _
  // Predicated region
  $region14: #{net_forward.5} parent=0 // pred_check
    _
  $region15: #{net_forward.5} parent=0 // pred_check_branch
    %19 = sbr.rel (0) target = $region17
  $region16: #{net_forward.5} parent=0 // pred_region
    _
  $region17: #{net_forward.5} parent=0 // pred_fallthru
    _
  // Predicated region
  $region18: #{net_forward.5} parent=0 // pred_check
    _
  $region19: #{net_forward.5} parent=0 // pred_check_branch
    %21 = sbr.rel (0) target = $region21
  $region20: #{net_forward.5} parent=0 // pred_region
    _
  $region21: #{net_forward.5} parent=0 // pred_fallthru
    _
  // Predicated region
  $region22: #{net_forward.5} parent=0 // pred_check
    _
  $region23: #{net_forward.5} parent=0 // pred_check_branch
    %23 = sbr.rel (0) target = $region25
  $region24: #{net_forward.5} parent=0 // pred_region
    _
  $region25: #{net_forward.5} parent=0 // pred_fallthru
    _
  // Predicated region
  $region26: #{net_forward.5} parent=0 // pred_check
    _
  $region27: #{net_forward.5} parent=0 // pred_check_branch
    %25 = sbr.rel (0) target = $region29
  $region28: #{net_forward.5} parent=0 // pred_region
    _
  $region29: #{net_forward.5} parent=0 // pred_fallthru
    _
  %v26 = vld [vmem:[%s1] sm:$0xff]
  %v27 = vld [vmem:[%s1 + $0x8] sm:$0xff]
  %v28 = vld [vmem:[%s1 + $0x10] sm:$0xff]
  %v29 = vld [vmem:[%s1 + $0x18] sm:$0xff]
  %v30 = vld [vmem:[%s1 + $0x20] sm:$0xff]
  %v31 = vld [vmem:[%s1 + $0x28] sm:$0xff]
  %v32 = vld [vmem:[%s1 + $0x30] sm:$0xff]
  %v33 = vld [vmem:[%s1 + $0x38] sm:$0xff]
  %v34 = vld [vmem:[%s1 + $0x40] sm:$0xff]
  %v35 = vld [vmem:[%s1 + $0x48] sm:$0xff]
  %v36 = vld [vmem:[%s1 + $0x50] sm:$0xff]
  %v37 = vld [vmem:[%s1 + $0x58] sm:$0xff]
  %v38 = vld [vmem:[%s1 + $0x60] sm:$0xff]
  %v39 = vld [vmem:[%s1 + $0x68] sm:$0xff]
  %v40 = vld [vmem:[%s1 + $0x70] sm:$0xff]
  %v41 = vld [vmem:[%s1 + $0x78] sm:$0xff]
  %v42 = vld [vmem:[%s1 + $0x80] sm:$0xff]
  %v43 = vld [vmem:[%s1 + $0x88] sm:$0xff]
  %v44 = vld [vmem:[%s1 + $0x90] sm:$0xff]
  %v45 = vld [vmem:[%s1 + $0x98] sm:$0xff]
  %v46 = vld [vmem:[%s1 + $0xa0] sm:$0xff]
  %v47 = vld [vmem:[%s1 + $0xa8] sm:$0xff]
  %v48 = vld [vmem:[%s1 + $0xb0] sm:$0xff]
  %v49 = vld [vmem:[%s1 + $0xb8] sm:$0xff]
  %v50 = vld [vmem:[%s1 + $0xc0] sm:$0xff]
  %v51 = vld [vmem:[%s1 + $0xc8] sm:$0xff]
  %v52 = vld [vmem:[%s1 + $0xd0] sm:$0xff]
  %v53 = vld [vmem:[%s1 + $0xd8] sm:$0xff]
  %v54 = vld [vmem:[%s1 + $0xe0] sm:$0xff]
  %v55 = vld [vmem:[%s1 + $0xe8] sm:$0xff]
  %v56 = vld [vmem:[%s1 + $0xf0] sm:$0xff]
  %v57 = vld [vmem:[%s1 + $0xf8] sm:$0xff]
  %v58 = vld [vmem:[%s0] sm:$0xff]
  %v59 = vld [vmem:[%s0 + $0x8] sm:$0xff]
  %v60 = vld [vmem:[%s0 + $0x10] sm:$0xff]
  %v61 = vld [vmem:[%s0 + $0x18] sm:$0xff]
  %v62 = vld [vmem:[%s0 + $0x20] sm:$0xff]
  %v63 = vld [vmem:[%s0 + $0x28] sm:$0xff]
  %v64 = vld [vmem:[%s0 + $0x30] sm:$0xff]
  %v65 = vld [vmem:[%s0 + $0x38] sm:$0xff]
  %v66 = vld [vmem:[%s0 + $0x40] sm:$0xff]
  %v67 = vld [vmem:[%s0 + $0x48] sm:$0xff]
  %v68 = vld [vmem:[%s0 + $0x50] sm:$0xff]
  %v69 = vld [vmem:[%s0 + $0x58] sm:$0xff]
  %v70 = vld [vmem:[%s0 + $0x60] sm:$0xff]
  %v71 = vld [vmem:[%s0 + $0x68] sm:$0xff]
  %v72 = vld [vmem:[%s0 + $0x70] sm:$0xff]
  %v73 = vld [vmem:[%s0 + $0x78] sm:$0xff]
  %v74 = vld [vmem:[%s0 + $0x80] sm:$0xff]
  %v75 = vld [vmem:[%s0 + $0x88] sm:$0xff]
  %v76 = vld [vmem:[%s0 + $0x90] sm:$0xff]
  %v77 = vld [vmem:[%s0 + $0x98] sm:$0xff]
  %v78 = vld [vmem:[%s0 + $0xa0] sm:$0xff]
  %v79 = vld [vmem:[%s0 + $0xa8] sm:$0xff]
  %v80 = vld [vmem:[%s0 + $0xb0] sm:$0xff]
  %v81 = vld [vmem:[%s0 + $0xb8] sm:$0xff]
  %v82 = vld [vmem:[%s0 + $0xc0] sm:$0xff]
  %v83 = vld [vmem:[%s0 + $0xc8] sm:$0xff]
  %v84 = vld [vmem:[%s0 + $0xd0] sm:$0xff]
  %v85 = vld [vmem:[%s0 + $0xd8] sm:$0xff]
  %v86 = vld [vmem:[%s0 + $0xe0] sm:$0xff]
  %v87 = vld [vmem:[%s0 + $0xe8] sm:$0xff]
  %v88 = vld [vmem:[%s0 + $0xf0] sm:$0xff]
  %v89 = vld [vmem:[%s0 + $0xf8] sm:$0xff]
  %v90 = vld [vmem:[%s2] sm:$0xff]
  %v91 = vld [vmem:[%s2 + $0x8] sm:$0xff]
  %v92 = vld [vmem:[%s2 + $0x10] sm:$0xff]
  %v93 = vld [vmem:[%s2 + $0x18] sm:$0xff]
  %v94 = vld [vmem:[%s2 + $0x20] sm:$0xff]
  %v95 = vld [vmem:[%s2 + $0x28] sm:$0xff]
  %v96 = vld [vmem:[%s2 + $0x30] sm:$0xff]
  %v97 = vld [vmem:[%s2 + $0x38] sm:$0xff]
  %v98 = vld [vmem:[%s2 + $0x40] sm:$0xff]
  %v99 = vld [vmem:[%s2 + $0x48] sm:$0xff]
  %v100 = vld [vmem:[%s2 + $0x50] sm:$0xff]
  %v101 = vld [vmem:[%s2 + $0x58] sm:$0xff]
  %v102 = vld [vmem:[%s2 + $0x60] sm:$0xff]
  %v103 = vld [vmem:[%s2 + $0x68] sm:$0xff]
  %v104 = vld [vmem:[%s2 + $0x70] sm:$0xff]
  %v105 = vld [vmem:[%s2 + $0x78] sm:$0xff]
  %107 = vset.pattern.permute.xlu0 0
  %108 = vperm.xlu0 %107, %v90
  %v109 = vpop.permute.xlu0 %108
  %112 = vset.pattern.permute.xlu0 0
  %113 = vperm.xlu0 %112, %v91
  %v114 = vpop.permute.xlu0 %113
  %117 = vset.pattern.permute.xlu0 0
  %118 = vperm.xlu0 %117, %v92
  %v119 = vpop.permute.xlu0 %118
  %122 = vset.pattern.permute.xlu0 0
  %123 = vperm.xlu0 %122, %v93
  %v124 = vpop.permute.xlu0 %123
  %127 = vset.pattern.permute.xlu0 0
  %128 = vperm.xlu0 %127, %v94
  %v129 = vpop.permute.xlu0 %128
  %132 = vset.pattern.permute.xlu0 0
  %133 = vperm.xlu0 %132, %v95
  %v134 = vpop.permute.xlu0 %133
  %137 = vset.pattern.permute.xlu0 0
  %138 = vperm.xlu0 %137, %v96
  %v139 = vpop.permute.xlu0 %138
  %142 = vset.pattern.permute.xlu0 0
  %143 = vperm.xlu0 %142, %v97
  %v144 = vpop.permute.xlu0 %143
  %147 = vset.pattern.permute.xlu0 0
  %148 = vperm.xlu0 %147, %v98
  %v149 = vpop.permute.xlu0 %148
  %152 = vset.pattern.permute.xlu0 0
  %153 = vperm.xlu0 %152, %v99
  %v154 = vpop.permute.xlu0 %153
  %157 = vset.pattern.permute.xlu0 0
  %158 = vperm.xlu0 %157, %v100
  %v159 = vpop.permute.xlu0 %158
  %162 = vset.pattern.permute.xlu0 0
  %163 = vperm.xlu0 %162, %v101
  %v164 = vpop.permute.xlu0 %163
  %167 = vset.pattern.permute.xlu0 0
  %168 = vperm.xlu0 %167, %v102
  %v169 = vpop.permute.xlu0 %168
  %172 = vset.pattern.permute.xlu0 0
  %173 = vperm.xlu0 %172, %v103
  %v174 = vpop.permute.xlu0 %173
  %177 = vset.pattern.permute.xlu0 0
  %178 = vperm.xlu0 %177, %v104
  %v179 = vpop.permute.xlu0 %178
  %182 = vset.pattern.permute.xlu0 0
  %183 = vperm.xlu0 %182, %v105
  %v184 = vpop.permute.xlu0 %183
  %186 = vmatprep.subr.mxu0 0.0
  %187 = vmatpush1.msra.mxu0 %v58
  %188 = vmatprep.subr.mxu0 0.0
  %189 = vmatpush1.msra.mxu0 %v59
  %190 = vmatprep.subr.mxu0 0.0
  %191 = vmatpush1.msra.mxu0 %v60
  %192 = vmatprep.subr.mxu0 0.0
  %193 = vmatpush1.msra.mxu0 %v61
  %194 = vmatprep.subr.mxu0 0.0
  %195 = vmatpush1.msra.mxu0 %v62
  %196 = vmatprep.subr.mxu0 0.0
  %197 = vmatpush1.msra.mxu0 %v63
  %198 = vmatprep.subr.mxu0 0.0
  %199 = vmatpush1.msra.mxu0 %v64
  %200 = vmatprep.subr.mxu0 0.0
  %201 = vmatpush1.msra.mxu0 %v65
  %202 = vmatprep.subr.mxu0 0.0
  %203 = vmatpush1.msra.mxu0 %v66
  %204 = vmatprep.subr.mxu0 0.0
  %205 = vmatpush1.msra.mxu0 %v67
  %206 = vmatprep.subr.mxu0 0.0
  %207 = vmatpush1.msra.mxu0 %v68
  %208 = vmatprep.subr.mxu0 0.0
  %209 = vmatpush1.msra.mxu0 %v69
  %210 = vmatprep.subr.mxu0 0.0
  %211 = vmatpush1.msra.mxu0 %v70
  %212 = vmatprep.subr.mxu0 0.0
  %213 = vmatpush1.msra.mxu0 %v71
  %214 = vmatprep.subr.mxu0 0.0
  %215 = vmatpush1.msra.mxu0 %v72
  %216 = vmatprep.subr.mxu0 0.0
  %217 = vmatpush1.msra.mxu0 %v73
  %218 = vmatprep.subr.mxu0 0.0
  %219 = vmatpush1.msra.mxu0 %v74
  %220 = vmatprep.subr.mxu0 0.0
  %221 = vmatpush1.msra.mxu0 %v75
  %222 = vmatprep.subr.mxu0 0.0
  %223 = vmatpush1.msra.mxu0 %v76
  %224 = vmatprep.subr.mxu0 0.0
  %225 = vmatpush1.msra.mxu0 %v77
  %226 = vmatprep.subr.mxu0 0.0
  %227 = vmatpush1.msra.mxu0 %v78
  %228 = vmatprep.subr.mxu0 0.0
  %229 = vmatpush1.msra.mxu0 %v79
  %230 = vmatprep.subr.mxu0 0.0
  %231 = vmatpush1.msra.mxu0 %v80
  %232 = vmatprep.subr.mxu0 0.0
  %233 = vmatpush1.msra.mxu0 %v81
  %234 = vmatprep.subr.mxu0 0.0
  %235 = vmatpush1.msra.mxu0 %v82
  %236 = vmatprep.subr.mxu0 0.0
  %237 = vmatpush1.msra.mxu0 %v83
  %238 = vmatprep.subr.mxu0 0.0
  %239 = vmatpush1.msra.mxu0 %v84
  %240 = vmatprep.subr.mxu0 0.0
  %241 = vmatpush1.msra.mxu0 %v85
  %242 = vmatprep.subr.mxu0 0.0
  %243 = vmatpush1.msra.mxu0 %v86
  %244 = vmatprep.subr.mxu0 0.0
  %245 = vmatpush1.msra.mxu0 %v87
  %246 = vmatprep.subr.mxu0 0.0
  %247 = vmatpush1.msra.mxu0 %v88
  %248 = vmatprep.subr.mxu0 0.0
  %249 = vmatpush1.msra.mxu0 %v89
  %250 = vmatprep.mubr.f32.mxu0 %v27
  %251 = vmatmul.mubr.f32.gmra.mrb[0].mxu0 %v26
  %v252 = vpop.f32.mrb[0].mxu0
  %v253 = vadd.f32 %v109, %v252
  %v254 = vpop.f32.mrb[0].mxu0
  %255 = vmatprep.mubr.f32.mxu0 %v29
  %256 = vmatmul.mubr.f32.gmra.mrb[0].mxu0 %v28
  %v257 = vpop.f32.mrb[0].mxu0
  %v258 = vadd.f32 %v114, %v257
  %v259 = vpop.f32.mrb[0].mxu0
  %260 = vmatprep.mubr.f32.mxu0 %v31
  %261 = vmatmul.mubr.f32.gmra.mrb[0].mxu0 %v30
  %v262 = vpop.f32.mrb[0].mxu0
  %v263 = vadd.f32 %v119, %v262
  %v264 = vpop.f32.mrb[0].mxu0
  %265 = vmatprep.mubr.f32.mxu0 %v33
  %266 = vmatmul.mubr.f32.gmra.mrb[0].mxu0 %v32
  %v267 = vpop.f32.mrb[0].mxu0
  %v268 = vadd.f32 %v124, %v267
  %v269 = vpop.f32.mrb[0].mxu0
  %270 = vmatprep.mubr.f32.mxu0 %v35
  %271 = vmatmul.mubr.f32.gmra.mrb[0].mxu0 %v34
  %v272 = vpop.f32.mrb[0].mxu0
  %v273 = vadd.f32 %v129, %v272
  %v274 = vpop.f32.mrb[0].mxu0
  %275 = vmatprep.mubr.f32.mxu0 %v37
  %276 = vmatmul.mubr.f32.gmra.mrb[0].mxu0 %v36
  %v277 = vpop.f32.mrb[0].mxu0
  %v278 = vadd.f32 %v134, %v277
  %v279 = vpop.f32.mrb[0].mxu0
  %280 = vmatprep.mubr.f32.mxu0 %v39
  %281 = vmatmul.mubr.f32.gmra.mrb[0].mxu0 %v38
  %v282 = vpop.f32.mrb[0].mxu0
  %v283 = vadd.f32 %v139, %v282
  %v284 = vpop.f32.mrb[0].mxu0
  %285 = vmatprep.mubr.f32.mxu0 %v41
  %286 = vmatmul.mubr.f32.gmra.mrb[0].mxu0 %v40
  %v287 = vpop.f32.mrb[0].mxu0
  %v288 = vadd.f32 %v144, %v287
  %v289 = vpop.f32.mrb[0].mxu0
  %290 = vmatprep.mubr.f32.mxu0 %v43
  %291 = vmatmul.mubr.f32.gmra.mrb[0].mxu0 %v42
  %v292 = vpop.f32.mrb[0].mxu0
  %v293 = vadd.f32 %v149, %v292
  %v294 = vpop.f32.mrb[0].mxu0
  %295 = vmatprep.mubr.f32.mxu0 %v45
  %296 = vmatmul.mubr.f32.gmra.mrb[0].mxu0 %v44
  %v297 = vpop.f32.mrb[0].mxu0
  %v298 = vadd.f32 %v154, %v297
  %v299 = vpop.f32.mrb[0].mxu0
  %300 = vmatprep.mubr.f32.mxu0 %v47
  %301 = vmatmul.mubr.f32.gmra.mrb[0].mxu0 %v46
  %v302 = vpop.f32.mrb[0].mxu0
  %v303 = vadd.f32 %v159, %v302
  %v304 = vpop.f32.mrb[0].mxu0
  %305 = vmatprep.mubr.f32.mxu0 %v49
  %306 = vmatmul.mubr.f32.gmra.mrb[0].mxu0 %v48
  %v307 = vpop.f32.mrb[0].mxu0
  %v308 = vadd.f32 %v164, %v307
  %v309 = vpop.f32.mrb[0].mxu0
  %310 = vmatprep.mubr.f32.mxu0 %v51
  %311 = vmatmul.mubr.f32.gmra.mrb[0].mxu0 %v50
  %v312 = vpop.f32.mrb[0].mxu0
  %v313 = vadd.f32 %v169, %v312
  %v314 = vpop.f32.mrb[0].mxu0
  %315 = vmatprep.mubr.f32.mxu0 %v53
  %316 = vmatmul.mubr.f32.gmra.mrb[0].mxu0 %v52
  %v317 = vpop.f32.mrb[0].mxu0
  %v318 = vadd.f32 %v174, %v317
  %v319 = vpop.f32.mrb[0].mxu0
  %320 = vmatprep.mubr.f32.mxu0 %v55
  %321 = vmatmul.mubr.f32.gmra.mrb[0].mxu0 %v54
  %v322 = vpop.f32.mrb[0].mxu0
  %v323 = vadd.f32 %v179, %v322
  %v324 = vpop.f32.mrb[0].mxu0
  %325 = vmatprep.mubr.f32.mxu0 %v57
  %326 = vmatmul.mubr.f32.gmra.mrb[0].mxu0 %v56
  %v327 = vpop.f32.mrb[0].mxu0
  %v328 = vadd.f32 %v184, %v327
  %v329 = vpop.f32.mrb[0].mxu0
  %330 = vdwg.mxu0
  %v331 = vmax.f32 %v253, 0.0
  %v332 = vmax.f32 %v258, 0.0
  %v333 = vmax.f32 %v263, 0.0
  %v334 = vmax.f32 %v268, 0.0
  %v335 = vmax.f32 %v273, 0.0
  %v336 = vmax.f32 %v278, 0.0
  %v337 = vmax.f32 %v283, 0.0
  %v338 = vmax.f32 %v288, 0.0
  %v339 = vmax.f32 %v293, 0.0
  %v340 = vmax.f32 %v298, 0.0
  %v341 = vmax.f32 %v303, 0.0
  %v342 = vmax.f32 %v308, 0.0
  %v343 = vmax.f32 %v313, 0.0
  %v344 = vmax.f32 %v318, 0.0
  %v345 = vmax.f32 %v323, 0.0
  %v346 = vmax.f32 %v328, 0.0
  %v347 = vld [vmem:[%s3] sm:$0xff]
  %v348 = vld [vmem:[%s3 + $0x8] sm:$0xff]
  %v349 = vld [vmem:[%s3 + $0x10] sm:$0xff]
  %v350 = vld [vmem:[%s3 + $0x18] sm:$0xff]
  %v351 = vld [vmem:[%s3 + $0x20] sm:$0xff]
  %v352 = vld [vmem:[%s3 + $0x28] sm:$0xff]
  %v353 = vld [vmem:[%s3 + $0x30] sm:$0xff]
  %v354 = vld [vmem:[%s3 + $0x38] sm:$0xff]
  %v355 = vld [vmem:[%s3 + $0x40] sm:$0xff]
  %v356 = vld [vmem:[%s3 + $0x48] sm:$0xff]
  %v357 = vld [vmem:[%s3 + $0x50] sm:$0xff]
  %v358 = vld [vmem:[%s3 + $0x58] sm:$0xff]
  %v359 = vld [vmem:[%s3 + $0x60] sm:$0xff]
  %v360 = vld [vmem:[%s3 + $0x68] sm:$0xff]
  %v361 = vld [vmem:[%s3 + $0x70] sm:$0xff]
  %v362 = vld [vmem:[%s3 + $0x78] sm:$0xff]
  %v363 = vld [vmem:[%s4] sm:$0xff]
  %v364 = vld [vmem:[%s4 + $0x8] sm:$0xff]
  %v365 = vld [vmem:[%s4 + $0x10] sm:$0xff]
  %v366 = vld [vmem:[%s4 + $0x18] sm:$0xff]
  %v367 = vld [vmem:[%s4 + $0x20] sm:$0xff]
  %v368 = vld [vmem:[%s4 + $0x28] sm:$0xff]
  %v369 = vld [vmem:[%s4 + $0x30] sm:$0xff]
  %v370 = vld [vmem:[%s4 + $0x38] sm:$0xff]
  %v371 = vld [vmem:[%s4 + $0x40] sm:$0xff]
  %v372 = vld [vmem:[%s4 + $0x48] sm:$0xff]
  %v373 = vld [vmem:[%s4 + $0x50] sm:$0xff]
  %v374 = vld [vmem:[%s4 + $0x58] sm:$0xff]
  %v375 = vld [vmem:[%s4 + $0x60] sm:$0xff]
  %v376 = vld [vmem:[%s4 + $0x68] sm:$0xff]
  %v377 = vld [vmem:[%s4 + $0x70] sm:$0xff]
  %v378 = vld [vmem:[%s4 + $0x78] sm:$0xff]
  %380 = vset.pattern.permute.xlu0 0
  %381 = vperm.xlu0 %380, %v363
  %v382 = vpop.permute.xlu0 %381
  %385 = vset.pattern.permute.xlu0 0
  %386 = vperm.xlu0 %385, %v364
  %v387 = vpop.permute.xlu0 %386
  %390 = vset.pattern.permute.xlu0 0
  %391 = vperm.xlu0 %390, %v365
  %v392 = vpop.permute.xlu0 %391
  %395 = vset.pattern.permute.xlu0 0
  %396 = vperm.xlu0 %395, %v366
  %v397 = vpop.permute.xlu0 %396
  %400 = vset.pattern.permute.xlu0 0
  %401 = vperm.xlu0 %400, %v367
  %v402 = vpop.permute.xlu0 %401
  %405 = vset.pattern.permute.xlu0 0
  %406 = vperm.xlu0 %405, %v368
  %v407 = vpop.permute.xlu0 %406
  %410 = vset.pattern.permute.xlu0 0
  %411 = vperm.xlu0 %410, %v369
  %v412 = vpop.permute.xlu0 %411
  %415 = vset.pattern.permute.xlu0 0
  %416 = vperm.xlu0 %415, %v370
  %v417 = vpop.permute.xlu0 %416
  %420 = vset.pattern.permute.xlu0 0
  %421 = vperm.xlu0 %420, %v371
  %v422 = vpop.permute.xlu0 %421
  %425 = vset.pattern.permute.xlu0 0
  %426 = vperm.xlu0 %425, %v372
  %v427 = vpop.permute.xlu0 %426
  %430 = vset.pattern.permute.xlu0 0
  %431 = vperm.xlu0 %430, %v373
  %v432 = vpop.permute.xlu0 %431
  %435 = vset.pattern.permute.xlu0 0
  %436 = vperm.xlu0 %435, %v374
  %v437 = vpop.permute.xlu0 %436
  %440 = vset.pattern.permute.xlu0 0
  %441 = vperm.xlu0 %440, %v375
  %v442 = vpop.permute.xlu0 %441
  %445 = vset.pattern.permute.xlu0 0
  %446 = vperm.xlu0 %445, %v376
  %v447 = vpop.permute.xlu0 %446
  %450 = vset.pattern.permute.xlu0 0
  %451 = vperm.xlu0 %450, %v377
  %v452 = vpop.permute.xlu0 %451
  %455 = vset.pattern.permute.xlu0 0
  %456 = vperm.xlu0 %455, %v378
  %v457 = vpop.permute.xlu0 %456
  %459 = vmatprep.subr.mxu0 0.0
  %460 = vmatpush1.msra.mxu0 %v331
  %461 = vmatprep.subr.mxu0 0.0
  %462 = vmatpush1.msra.mxu0 %v332
  %463 = vmatprep.subr.mxu0 0.0
  %464 = vmatpush1.msra.mxu0 %v333
  %465 = vmatprep.subr.mxu0 0.0
  %466 = vmatpush1.msra.mxu0 %v334
  %467 = vmatprep.subr.mxu0 0.0
  %468 = vmatpush1.msra.mxu0 %v335
  %469 = vmatprep.subr.mxu0 0.0
  %470 = vmatpush1.msra.mxu0 %v336
  %471 = vmatprep.subr.mxu0 0.0
  %472 = vmatpush1.msra.mxu0 %v337
  %473 = vmatprep.subr.mxu0 0.0
  %474 = vmatpush1.msra.mxu0 %v338
  %475 = vmatprep.subr.mxu0 0.0
  %476 = vmatpush1.msra.mxu0 %v339
  %477 = vmatprep.subr.mxu0 0.0
  %478 = vmatpush1.msra.mxu0 %v340
  %479 = vmatprep.subr.mxu0 0.0
  %480 = vmatpush1.msra.mxu0 %v341
  %481 = vmatprep.subr.mxu0 0.0
  %482 = vmatpush1.msra.mxu0 %v342
  %483 = vmatprep.subr.mxu0 0.0
  %484 = vmatpush1.msra.mxu0 %v343
  %485 = vmatprep.subr.mxu0 0.0
  %486 = vmatpush1.msra.mxu0 %v344
  %487 = vmatprep.subr.mxu0 0.0
  %488 = vmatpush1.msra.mxu0 %v345
  %489 = vmatprep.subr.mxu0 0.0
  %490 = vmatpush1.msra.mxu0 %v346
  %491 = vmatprep.subr.mxu0 0.0
  %492 = vmatpush1.msra.mxu0 0.0
  %493 = vmatprep.subr.mxu0 0.0
  %494 = vmatpush1.msra.mxu0 0.0
  %495 = vmatprep.subr.mxu0 0.0
  %496 = vmatpush1.msra.mxu0 0.0
  %497 = vmatprep.subr.mxu0 0.0
  %498 = vmatpush1.msra.mxu0 0.0
  %499 = vmatprep.subr.mxu0 0.0
  %500 = vmatpush1.msra.mxu0 0.0
  %501 = vmatprep.subr.mxu0 0.0
  %502 = vmatpush1.msra.mxu0 0.0
  %503 = vmatprep.subr.mxu0 0.0
  %504 = vmatpush1.msra.mxu0 0.0
  %505 = vmatprep.subr.mxu0 0.0
  %506 = vmatpush1.msra.mxu0 0.0
  %507 = vmatprep.subr.mxu0 0.0
  %508 = vmatpush1.msra.mxu0 0.0
  %509 = vmatprep.subr.mxu0 0.0
  %510 = vmatpush1.msra.mxu0 0.0
  %511 = vmatprep.subr.mxu0 0.0
  %512 = vmatpush1.msra.mxu0 0.0
  %513 = vmatprep.subr.mxu0 0.0
  %514 = vmatpush1.msra.mxu0 0.0
  %515 = vmatprep.subr.mxu0 0.0
  %516 = vmatpush1.msra.mxu0 0.0
  %517 = vmatprep.subr.mxu0 0.0
  %518 = vmatpush1.msra.mxu0 0.0
  %519 = vmatprep.subr.mxu0 0.0
  %520 = vmatpush1.msra.mxu0 0.0
  %521 = vmatprep.subr.mxu0 0.0
  %522 = vmatpush1.msra.mxu0 0.0
  %523 = vmatprep.mubr.f32.mxu0 0.0
  %524 = vmatmul.mubr.f32.gmra.mrb[0].mxu0 %v347
  %v525 = vpop.f32.mrb[0].mxu0
  %v526 = vadd.f32 %v382, %v525
  %v527 = vpop.f32.mrb[0].mxu0
  %528 = vmatprep.mubr.f32.mxu0 0.0
  %529 = vmatmul.mubr.f32.gmra.mrb[0].mxu0 %v348
  %v530 = vpop.f32.mrb[0].mxu0
  %v531 = vadd.f32 %v387, %v530
  %v532 = vpop.f32.mrb[0].mxu0
  %533 = vmatprep.mubr.f32.mxu0 0.0
  %534 = vmatmul.mubr.f32.gmra.mrb[0].mxu0 %v349
  %v535 = vpop.f32.mrb[0].mxu0
  %v536 = vadd.f32 %v392, %v535
  %v537 = vpop.f32.mrb[0].mxu0
  %538 = vmatprep.mubr.f32.mxu0 0.0
  %539 = vmatmul.mubr.f32.gmra.mrb[0].mxu0 %v350
  %v540 = vpop.f32.mrb[0].mxu0
  %v541 = vadd.f32 %v397, %v540
  %v542 = vpop.f32.mrb[0].mxu0
  %543 = vmatprep.mubr.f32.mxu0 0.0
  %544 = vmatmul.mubr.f32.gmra.mrb[0].mxu0 %v351
  %v545 = vpop.f32.mrb[0].mxu0
  %v546 = vadd.f32 %v402, %v545
  %v547 = vpop.f32.mrb[0].mxu0
  %548 = vmatprep.mubr.f32.mxu0 0.0
  %549 = vmatmul.mubr.f32.gmra.mrb[0].mxu0 %v352
  %v550 = vpop.f32.mrb[0].mxu0
  %v551 = vadd.f32 %v407, %v550
  %v552 = vpop.f32.mrb[0].mxu0
  %553 = vmatprep.mubr.f32.mxu0 0.0
  %554 = vmatmul.mubr.f32.gmra.mrb[0].mxu0 %v353
  %v555 = vpop.f32.mrb[0].mxu0
  %v556 = vadd.f32 %v412, %v555
  %v557 = vpop.f32.mrb[0].mxu0
  %558 = vmatprep.mubr.f32.mxu0 0.0
  %559 = vmatmul.mubr.f32.gmra.mrb[0].mxu0 %v354
  %v560 = vpop.f32.mrb[0].mxu0
  %v561 = vadd.f32 %v417, %v560
  %v562 = vpop.f32.mrb[0].mxu0
  %563 = vmatprep.mubr.f32.mxu0 0.0
  %564 = vmatmul.mubr.f32.gmra.mrb[0].mxu0 %v355
  %v565 = vpop.f32.mrb[0].mxu0
  %v566 = vadd.f32 %v422, %v565
  %v567 = vpop.f32.mrb[0].mxu0
  %568 = vmatprep.mubr.f32.mxu0 0.0
  %569 = vmatmul.mubr.f32.gmra.mrb[0].mxu0 %v356
  %v570 = vpop.f32.mrb[0].mxu0
  %v571 = vadd.f32 %v427, %v570
  %v572 = vpop.f32.mrb[0].mxu0
  %573 = vmatprep.mubr.f32.mxu0 0.0
  %574 = vmatmul.mubr.f32.gmra.mrb[0].mxu0 %v357
  %v575 = vpop.f32.mrb[0].mxu0
  %v576 = vadd.f32 %v432, %v575
  %v577 = vpop.f32.mrb[0].mxu0
  %578 = vmatprep.mubr.f32.mxu0 0.0
  %579 = vmatmul.mubr.f32.gmra.mrb[0].mxu0 %v358
  %v580 = vpop.f32.mrb[0].mxu0
  %v581 = vadd.f32 %v437, %v580
  %v582 = vpop.f32.mrb[0].mxu0
  %583 = vmatprep.mubr.f32.mxu0 0.0
  %584 = vmatmul.mubr.f32.gmra.mrb[0].mxu0 %v359
  %v585 = vpop.f32.mrb[0].mxu0
  %v586 = vadd.f32 %v442, %v585
  %v587 = vpop.f32.mrb[0].mxu0
  %588 = vmatprep.mubr.f32.mxu0 0.0
  %589 = vmatmul.mubr.f32.gmra.mrb[0].mxu0 %v360
  %v590 = vpop.f32.mrb[0].mxu0
  %v591 = vadd.f32 %v447, %v590
  %v592 = vpop.f32.mrb[0].mxu0
  %593 = vmatprep.mubr.f32.mxu0 0.0
  %594 = vmatmul.mubr.f32.gmra.mrb[0].mxu0 %v361
  %v595 = vpop.f32.mrb[0].mxu0
  %v596 = vadd.f32 %v452, %v595
  %v597 = vpop.f32.mrb[0].mxu0
  %598 = vmatprep.mubr.f32.mxu0 0.0
  %599 = vmatmul.mubr.f32.gmra.mrb[0].mxu0 %v362
  %v600 = vpop.f32.mrb[0].mxu0
  %v601 = vadd.f32 %v457, %v600
  %v602 = vpop.f32.mrb[0].mxu0
  %603 = vdwg.mxu0
  %v604 = vmax.f32 %v526, 0.0
  %v605 = vmax.f32 %v531, 0.0
  %v606 = vmax.f32 %v536, 0.0
  %v607 = vmax.f32 %v541, 0.0
  %v608 = vmax.f32 %v546, 0.0
  %v609 = vmax.f32 %v551, 0.0
  %v610 = vmax.f32 %v556, 0.0
  %v611 = vmax.f32 %v561, 0.0
  %v612 = vmax.f32 %v566, 0.0
  %v613 = vmax.f32 %v571, 0.0
  %v614 = vmax.f32 %v576, 0.0
  %v615 = vmax.f32 %v581, 0.0
  %v616 = vmax.f32 %v586, 0.0
  %v617 = vmax.f32 %v591, 0.0
  %v618 = vmax.f32 %v596, 0.0
  %v619 = vmax.f32 %v601, 0.0
  %v620 = vld [vmem:[%s5] sm:$0xff]
  %v621 = vld [vmem:[%s5 + $0x8] sm:$0x3]
  %v622 = vld [vmem:[%s6] sm:$0xff]
  %v623 = vld [vmem:[%s6 + $0x8] sm:$0x3]
  %625 = vset.pattern.permute.xlu0 0
  %626 = vperm.xlu0 %625, %v622
  %v627 = vpop.permute.xlu0 %626
  %630 = vset.pattern.permute.xlu0 0
  %631 = vperm.xlu0 %630, %v623
  %v632 = vpop.permute.xlu0 %631
  %634 = vmatprep.subr.mxu0 0.0
  %635 = vmatpush1.msra.mxu0 %v604
  %636 = vmatprep.subr.mxu0 0.0
  %637 = vmatpush1.msra.mxu0 %v605
  %638 = vmatprep.subr.mxu0 0.0
  %639 = vmatpush1.msra.mxu0 %v606
  %640 = vmatprep.subr.mxu0 0.0
  %641 = vmatpush1.msra.mxu0 %v607
  %642 = vmatprep.subr.mxu0 0.0
  %643 = vmatpush1.msra.mxu0 %v608
  %644 = vmatprep.subr.mxu0 0.0
  %645 = vmatpush1.msra.mxu0 %v609
  %646 = vmatprep.subr.mxu0 0.0
  %647 = vmatpush1.msra.mxu0 %v610
  %648 = vmatprep.subr.mxu0 0.0
  %649 = vmatpush1.msra.mxu0 %v611
  %650 = vmatprep.subr.mxu0 0.0
  %651 = vmatpush1.msra.mxu0 %v612
  %652 = vmatprep.subr.mxu0 0.0
  %653 = vmatpush1.msra.mxu0 %v613
  %654 = vmatprep.subr.mxu0 0.0
  %655 = vmatpush1.msra.mxu0 %v614
  %656 = vmatprep.subr.mxu0 0.0
  %657 = vmatpush1.msra.mxu0 %v615
  %658 = vmatprep.subr.mxu0 0.0
  %659 = vmatpush1.msra.mxu0 %v616
  %660 = vmatprep.subr.mxu0 0.0
  %661 = vmatpush1.msra.mxu0 %v617
  %662 = vmatprep.subr.mxu0 0.0
  %663 = vmatpush1.msra.mxu0 %v618
  %664 = vmatprep.subr.mxu0 0.0
  %665 = vmatpush1.msra.mxu0 %v619
  %666 = vmatprep.subr.mxu0 0.0
  %667 = vmatpush1.msra.mxu0 0.0
  %668 = vmatprep.subr.mxu0 0.0
  %669 = vmatpush1.msra.mxu0 0.0
  %670 = vmatprep.subr.mxu0 0.0
  %671 = vmatpush1.msra.mxu0 0.0
  %672 = vmatprep.subr.mxu0 0.0
  %673 = vmatpush1.msra.mxu0 0.0
  %674 = vmatprep.subr.mxu0 0.0
  %675 = vmatpush1.msra.mxu0 0.0
  %676 = vmatprep.subr.mxu0 0.0
  %677 = vmatpush1.msra.mxu0 0.0
  %678 = vmatprep.subr.mxu0 0.0
  %679 = vmatpush1.msra.mxu0 0.0
  %680 = vmatprep.subr.mxu0 0.0
  %681 = vmatpush1.msra.mxu0 0.0
  %682 = vmatprep.subr.mxu0 0.0
  %683 = vmatpush1.msra.mxu0 0.0
  %684 = vmatprep.subr.mxu0 0.0
  %685 = vmatpush1.msra.mxu0 0.0
  %686 = vmatprep.subr.mxu0 0.0
  %687 = vmatpush1.msra.mxu0 0.0
  %688 = vmatprep.subr.mxu0 0.0
  %689 = vmatpush1.msra.mxu0 0.0
  %690 = vmatprep.subr.mxu0 0.0
  %691 = vmatpush1.msra.mxu0 0.0
  %692 = vmatprep.subr.mxu0 0.0
  %693 = vmatpush1.msra.mxu0 0.0
  %694 = vmatprep.subr.mxu0 0.0
  %695 = vmatpush1.msra.mxu0 0.0
  %696 = vmatprep.subr.mxu0 0.0
  %697 = vmatpush1.msra.mxu0 0.0
  %698 = vmatprep.mubr.f32.mxu0 0.0
  %699 = vmatmul.mubr.f32.gmra.mrb[0].mxu0 %v620
  %v700 = vpop.f32.mrb[0].mxu0
  %v701 = vadd.f32 %v627, %v700
  %v702 = vpop.f32.mrb[0].mxu0
  %703 = vmatprep.mubr.f32.mxu0 0.0
  %704 = vmatmul.mubr.f32.gmra.mrb[0].mxu0 %v621
  %v705 = vpop.f32.mrb[0].mxu0
  %v706 = vadd.f32 %v632, %v705
  %v707 = vpop.f32.mrb[0].mxu0
  %708 = vdwg.mxu0
  %709 = vst [vmem:[%s7] sm:$0xff] %v701
  %710 = vst [vmem:[%s7 + $0x8] sm:$0x3] %v706
  // Predicated region
  $region30: #{net_forward.5} parent=0 // pred_check
    _
  $region31: #{net_forward.5} parent=0 // pred_check_branch
    %712 = sbr.rel (0) target = $region33
  $region32: #{net_forward.5} parent=0 // pred_region
    _
  $region33: #{net_forward.5} parent=0 // pred_fallthru
    _
  // Predicated region
  $region34: #{net_forward.5} parent=0 // pred_check
    _
  $region35: #{net_forward.5} parent=0 // pred_check_branch
    %714 = sbr.rel (0) target = $region37
  $region36: #{net_forward.5} parent=0 // pred_region
    _
  $region37: #{net_forward.5} parent=0 // pred_fallthru
    _

</llo_original>
